<compile_context>
chip_gen: v6e
topology: v6e:2x2x1
jax: 0.10.0
libtpu: 0.0.40
codegen_flags: <defaults>
</compile_context>

<pallas_src>
import functools

import jax
import jax.numpy as jnp
from jax.experimental import pallas as pl
from jax.experimental.pallas import tpu as pltpu

_LANE = 128


def _round_up(x, m):
    return (x + m - 1) // m * m


# --------------------------------------------------------------------------- #
# Pallas kernel: one normalized-propagation layer  out = f(dinv⊙(A@Zs) + self) #
# --------------------------------------------------------------------------- #
def _prop_kernel(a_ref, zs_ref, dinv_ref, self_ref, out_ref, acc_ref, *, apply_relu):
    k = pl.program_id(1)

    @pl.when(k == 0)
    def _():
        acc_ref[...] = jnp.zeros_like(acc_ref)

    # bf16 x bf16 -> f32 accumulate on the MXU.
    acc_ref[...] += jnp.dot(a_ref[...], zs_ref[...],
                            preferred_element_type=jnp.float32)

    @pl.when(k == pl.num_programs(1) - 1)
    def _():
        out = dinv_ref[...] * acc_ref[...] + self_ref[...]
        if apply_relu:
            out = jnp.maximum(out, 0.0)
        out_ref[...] = out.astype(out_ref.dtype)


def _gcn_propagate(a_bf16, zs_bf16, dinv, selfterm, *, apply_relu, tile_n):
    """out = maybe_relu(dinv ⊙ (A @ Zs) + selfterm), tiled over rows / reduce."""
    n_pad = a_bf16.shape[0]
    feat = zs_bf16.shape[1]
    grid = (n_pad // tile_n, n_pad // tile_n)

    kernel = functools.partial(_prop_kernel, apply_relu=apply_relu)
    return pl.pallas_call(
        kernel,
        out_shape=jax.ShapeDtypeStruct((n_pad, feat), jnp.float32),
        grid_spec=pltpu.PrefetchScalarGridSpec(
            num_scalar_prefetch=0,
            grid=grid,
            in_specs=[
                pl.BlockSpec((tile_n, tile_n), lambda i, k: (i, k)),  # A tile (bf16)
                pl.BlockSpec((tile_n, feat), lambda i, k: (k, 0)),    # Zs tile (bf16)
                pl.BlockSpec((tile_n, 1), lambda i, k: (i, 0)),       # dinv rows (f32)
                pl.BlockSpec((tile_n, feat), lambda i, k: (i, 0)),    # self-loop+bias (f32)
            ],
            out_specs=pl.BlockSpec((tile_n, feat), lambda i, k: (i, 0)),
            scratch_shapes=[pltpu.VMEM((tile_n, feat), jnp.float32)],
        ),
        compiler_params=pltpu.CompilerParams(
            dimension_semantics=("parallel", "arbitrary"),
        ),
    )(a_bf16, zs_bf16, dinv, selfterm)


# --------------------------------------------------------------------------- #
# JAX wrapper: padding, gcn_norm scalars, tiny matmuls, two propagation calls  #
# --------------------------------------------------------------------------- #
@functools.partial(jax.jit, static_argnames=("tile_n",))
def _emp_gcn(a_dense, x, w1, b1, w2, b2, *, tile_n=256):
    n, fin = x.shape
    h_dim = w1.shape[1]
    c_dim = w2.shape[1]

    n_pad = _round_up(n, tile_n)
    h_pad = _round_up(h_dim, _LANE)
    c_pad = _round_up(c_dim, _LANE)

    # gcn_norm fill_diag semantics: diagonal is replaced by 1.0.  We zero the
    # stored diagonal and handle the unit self-loop analytically (dinv² ⊙ Z).
    diag = jnp.arange(n)
    a_offdiag = a_dense.at[diag, diag].set(0.0)
    a_pad = jnp.zeros((n_pad, n_pad), jnp.float32).at[:n, :n].set(a_offdiag)
    a_bf16 = a_pad.astype(jnp.bfloat16)

    deg = jnp.sum(a_pad, axis=1, keepdims=True) + 1.0        # +1 for the self loop
    dinv = jnp.where(deg > 0.0, jax.lax.rsqrt(deg), 0.0)     # [n_pad, 1], f32

    # Lane-pad the (tiny) layer weights; padded columns/rows are zero.
    w1p = jnp.zeros((fin, h_pad), jnp.float32).at[:, :h_dim].set(w1)
    b1p = jnp.zeros((1, h_pad), jnp.float32).at[:, :h_dim].set(b1)
    w2p = jnp.zeros((h_pad, c_pad), jnp.float32).at[:h_dim, :c_dim].set(w2)
    b2p = jnp.zeros((1, c_pad), jnp.float32).at[:, :c_dim].set(b2)
    x_pad = jnp.zeros((n_pad, fin), jnp.float32).at[:n, :].set(x)

    # ----- layer 1: relu(Â (X W1) + b1) -----
    z1 = x_pad @ w1p                                         # tiny K=fin matmul (XLA)
    h = _gcn_propagate(a_bf16,
                       (dinv * z1).astype(jnp.bfloat16),
                       dinv,
                       dinv * dinv * z1 + b1p,
                       apply_relu=True, tile_n=tile_n)

    # TODO(synk): F.dropout(h, p) between layers needs pltpu PRNG; the module
    # default dropout=0.0 is the identity, which is what we reproduce here.

    # ----- layer 2: Â (h W2) + b2 -----
    z2 = h @ w2p
    out_pad = _gcn_propagate(a_bf16,
                             (dinv * z2).astype(jnp.bfloat16),
                             dinv,
                             dinv * dinv * z2 + b2p,
                             apply_relu=False, tile_n=tile_n)

    return out_pad[:n, :c_dim]


def _relaxed_bernoulli_edge_values(drop_edge_param, temperature, key):
    """RelaxedBernoulli(temperature, probs=sigmoid(drop_edge)).rsample() + hard mask."""
    probs = jax.nn.sigmoid(drop_edge_param)
    logits = jnp.log(probs) - jnp.log1p(-probs)
    u = jax.random.uniform(key, drop_edge_param.shape,
                           minval=1e-6, maxval=1.0 - 1e-6)
    logistic = jnp.log(u) - jnp.log1p(-u)
    sample = jax.nn.sigmoid((logits + logistic) / temperature)
    mask = (sample > 0.5).astype(sample.dtype)
    return sample * mask


def emp_forward(x, row, col, params, drop, temperature=0.1, key=None, tile_n=256):
    """Reproduces EMP.forward(x, edge_index, drop, temperature).

    Returns (out [N, C], dense adjacency values [N, N]) — the dense analogue of
    the (out, SparseTensor edge_index) pair returned by the PyTorch module.
    """
    n = x.shape[0]
    if drop == 0:
        vals = jnp.ones(row.shape[0], dtype=jnp.float32)
    else:
        vals = _relaxed_bernoulli_edge_values(params["drop_edge"], temperature, key)
    # Duplicate (row, col) edges are summed, matching sparse-matmul semantics.
    a_dense = jnp.zeros((n, n), dtype=jnp.float32).at[row, col].add(vals)
    out = _emp_gcn(a_dense, x,
                   params["w1"], params["b1"],
                   params["w2"], params["b2"],
                   tile_n=tile_n)
    return out, a_dense


def _reference(a_dense, x, w1, b1, w2, b2):
    """Pure-JAX f32 reference of the same math (gcn_norm fill_diag=1)."""
    n = a_dense.shape[0]
    diag = jnp.arange(n)
    a = a_dense.at[diag, diag].set(1.0)
    deg = jnp.sum(a, axis=1, keepdims=True)
    dinv = jnp.where(deg > 0.0, 1.0 / jnp.sqrt(deg), 0.0)
    a_norm = dinv * a * dinv.reshape(1, n)
    h = jnp.maximum(a_norm @ (x @ w1) + b1, 0.0)
    return a_norm @ (h @ w2) + b2


if __name__ == "__main__":
    # Small, deterministic problem sizes.
    N = 64            # number of graph nodes
    IN_FEATURE = 16
    HIDDEN = 32
    NUM_CLASSES = 8
    EDGE_NUM = 256    # number of directed edges

    key = jax.random.PRNGKey(0)
    k_x, k_row, k_col, k_w1, k_b1, k_w2, k_b2, k_de, k_rb = jax.random.split(key, 9)

    x = jax.random.normal(k_x, (N, IN_FEATURE), dtype=jnp.float32)
    row = jax.random.randint(k_row, (EDGE_NUM,), 0, N, dtype=jnp.int32)
    col = jax.random.randint(k_col, (EDGE_NUM,), 0, N, dtype=jnp.int32)

    params = {
        # GCNConv weights (lin: in -> out) and biases, deterministic init.
        "w1": jax.random.normal(k_w1, (IN_FEATURE, HIDDEN), dtype=jnp.float32) * 0.1,
        "b1": jax.random.normal(k_b1, (1, HIDDEN), dtype=jnp.float32) * 0.01,
        "w2": jax.random.normal(k_w2, (HIDDEN, NUM_CLASSES), dtype=jnp.float32) * 0.1,
        "b2": jax.random.normal(k_b2, (1, NUM_CLASSES), dtype=jnp.float32) * 0.01,
        # nn.Parameter drop_edge ~ Normal(0, 1), shape [edge_num].
        "drop_edge": jax.random.normal(k_de, (EDGE_NUM,), dtype=jnp.float32),
    }

    # drop == 0 branch (edge values = ones).
    out0, adj0 = emp_forward(x, row, col, params, drop=0)
    out0 = jax.block_until_ready(out0)

    # drop != 0 branch (RelaxedBernoulli-sampled, hard-masked edge weights).
    out1, adj1 = emp_forward(x, row, col, params, drop=1,
                             temperature=0.1, key=k_rb)
    out1 = jax.block_until_ready(out1)

    # Sanity check against a pure-f32 JAX reference.  The kernel feeds bf16
    # operands to the MXU (f32 accumulation), so use a bf16-appropriate
    # tolerance; observed error is O(1e-3), well inside 2e-2.
    ref0 = _reference(adj0, x, params["w1"], params["b1"], params["w2"], params["b2"])
    ref1 = _reference(adj1, x, params["w1"], params["b1"], params["w2"], params["b2"])
    assert jnp.allclose(out0, ref0, atol=2e-2, rtol=2e-2)
    assert jnp.allclose(out1, ref1, atol=2e-2, rtol=2e-2)
    assert out0.shape == (N, NUM_CLASSES) and out1.shape == (N, NUM_CLASSES)
    assert jnp.all(jnp.isfinite(out0)) and jnp.all(jnp.isfinite(out1))

    print("KERNEL_OK")
</pallas_src>

<mosaic_0001>
module attributes {stable_mosaic.version = 11 : i64} {
  func.func @_prop_kernel(%arg0: i32, %arg1: i32, %arg2: memref<256x256xbf16, #tpu.memory_space<vmem>>, %arg3: memref<256x128xbf16, #tpu.memory_space<vmem>>, %arg4: memref<256x1xf32, #tpu.memory_space<vmem>>, %arg5: memref<256x128xf32, #tpu.memory_space<vmem>>, %arg6: memref<256x128xf32, #tpu.memory_space<vmem>>, %arg7: memref<256x128xf32, #tpu.memory_space<vmem>>) attributes {dimension_semantics = [#tpu.dimension_semantics<parallel>, #tpu.dimension_semantics<arbitrary>], iteration_bounds = array<i64: 1, 1>, scalar_prefetch = 0 : i64, scratch_operands = 1 : i64, tpu.core_type = #tpu.core_type<tc>, window_params = [{transform_indices = @transform_0, window_bounds = array<i64: 256, 256>}, {transform_indices = @transform_1, window_bounds = array<i64: 256, 128>}, {transform_indices = @transform_2, window_bounds = array<i64: 256, 1>}, {transform_indices = @transform_3, window_bounds = array<i64: 256, 128>}, {transform_indices = @transform_4, window_bounds = array<i64: 256, 128>}]} {
    %c0_i32 = arith.constant 0 : i32
    %0 = arith.cmpi eq, %arg1, %c0_i32 : i32
    %1 = arith.extui %0 : i1 to i32
    %c0_i32_0 = arith.constant 0 : i32
    %2 = arith.cmpi ne, %1, %c0_i32_0 : i32
    scf.if %2 {
      %cst_10 = arith.constant 0.000000e+00 : f32
      %12 = vector.broadcast %cst_10 : f32 to vector<256x128xf32>
      %c0_11 = arith.constant 0 : index
      %c0_12 = arith.constant 0 : index
      %13 = vector.load %arg7[%c0_11, %c0_12] : memref<256x128xf32, #tpu.memory_space<vmem>>, vector<256x128xf32>
      tpu.vector_store %arg7[%c0_11, %c0_12], %12 {strides = array<i32>} : memref<256x128xf32, #tpu.memory_space<vmem>>, vector<256x128xf32>,
    } else {
    }
    %c0 = arith.constant 0 : index
    %c0_1 = arith.constant 0 : index
    %3 = vector.load %arg7[%c0, %c0_1] : memref<256x128xf32, #tpu.memory_space<vmem>>, vector<256x128xf32>
    %c0_2 = arith.constant 0 : index
    %c0_3 = arith.constant 0 : index
    %4 = vector.load %arg2[%c0_2, %c0_3] : memref<256x256xbf16, #tpu.memory_space<vmem>>, vector<256x256xbf16>
    %c0_4 = arith.constant 0 : index
    %c0_5 = arith.constant 0 : index
    %5 = vector.load %arg3[%c0_4, %c0_5] : memref<256x128xbf16, #tpu.memory_space<vmem>>, vector<256x128xbf16>
    %cst = arith.constant dense<0.000000e+00> : vector<256x128xf32>
    %6 = tpu.matmul %4, %5, %cst {dimension_numbers = #tpu.dot_dimension_numbers<[1], [0], [0], [1], [0, 0, 1, 1], [], []>} : vector<256x256xbf16>, vector<256x128xbf16>, vector<256x128xf32> -> vector<256x128xf32>
    %7 = arith.addf %3, %6 : vector<256x128xf32>
    %c0_6 = arith.constant 0 : index
    %c0_7 = arith.constant 0 : index
    %8 = vector.load %arg7[%c0_6, %c0_7] : memref<256x128xf32, #tpu.memory_space<vmem>>, vector<256x128xf32>
    tpu.vector_store %arg7[%c0_6, %c0_7], %7 {strides = array<i32>} : memref<256x128xf32, #tpu.memory_space<vmem>>, vector<256x128xf32>,
    %c0_i32_8 = arith.constant 0 : i32
    %9 = arith.cmpi eq, %arg1, %c0_i32_8 : i32
    %10 = arith.extui %9 : i1 to i32
    %c0_i32_9 = arith.constant 0 : i32
    %11 = arith.cmpi ne, %10, %c0_i32_9 : i32
    scf.if %11 {
      %c0_10 = arith.constant 0 : index
      %c0_11 = arith.constant 0 : index
      %12 = vector.load %arg4[%c0_10, %c0_11] : memref<256x1xf32, #tpu.memory_space<vmem>>, vector<256x1xf32>
      %c0_12 = arith.constant 0 : index
      %c0_13 = arith.constant 0 : index
      %13 = vector.load %arg7[%c0_12, %c0_13] : memref<256x128xf32, #tpu.memory_space<vmem>>, vector<256x128xf32>
      %14 = vector.broadcast %12 : vector<256x1xf32> to vector<256x128xf32>
      %15 = arith.mulf %14, %13 : vector<256x128xf32>
      %c0_14 = arith.constant 0 : index
      %c0_15 = arith.constant 0 : index
      %16 = vector.load %arg5[%c0_14, %c0_15] : memref<256x128xf32, #tpu.memory_space<vmem>>, vector<256x128xf32>
      %17 = arith.addf %15, %16 : vector<256x128xf32>
      %cst_16 = arith.constant 0.000000e+00 : f32
      %18 = vector.broadcast %cst_16 : f32 to vector<256x128xf32>
      %19 = arith.maximumf %17, %18 : vector<256x128xf32>
      %c0_17 = arith.constant 0 : index
      %c0_18 = arith.constant 0 : index
      %20 = vector.load %arg6[%c0_17, %c0_18] : memref<256x128xf32, #tpu.memory_space<vmem>>, vector<256x128xf32>
      tpu.vector_store %arg6[%c0_17, %c0_18], %19 {strides = array<i32>} : memref<256x128xf32, #tpu.memory_space<vmem>>, vector<256x128xf32>,
    } else {
    }
    return
  }
  func.func @transform_0(%arg0: i32, %arg1: i32) -> (i32, i32) {
    %c0_i32 = arith.constant 0 : i32
    return %arg0, %arg1 : i32, i32
  }
  func.func @transform_1(%arg0: i32, %arg1: i32) -> (i32, i32) {
    %c0_i32 = arith.constant 0 : i32
    %c0_i32_0 = arith.constant 0 : i32
    return %arg1, %c0_i32 : i32, i32
  }
  func.func @transform_2(%arg0: i32, %arg1: i32) -> (i32, i32) {
    %c0_i32 = arith.constant 0 : i32
    %c0_i32_0 = arith.constant 0 : i32
    return %arg0, %c0_i32 : i32, i32
  }
  func.func @transform_3(%arg0: i32, %arg1: i32) -> (i32, i32) {
    %c0_i32 = arith.constant 0 : i32
    %c0_i32_0 = arith.constant 0 : i32
    return %arg0, %c0_i32 : i32, i32
  }
  func.func @transform_4(%arg0: i32, %arg1: i32) -> (i32, i32) {
    %c0_i32 = arith.constant 0 : i32
    %c0_i32_0 = arith.constant 0 : i32
    return %arg0, %c0_i32 : i32, i32
  }
}

module attributes {stable_mosaic.version = 11 : i64} {
  func.func @_prop_kernel(%arg0: i32, %arg1: i32, %arg2: memref<256x256xbf16, #tpu.memory_space<vmem>>, %arg3: memref<256x128xbf16, #tpu.memory_space<vmem>>, %arg4: memref<256x1xf32, #tpu.memory_space<vmem>>, %arg5: memref<256x128xf32, #tpu.memory_space<vmem>>, %arg6: memref<256x128xf32, #tpu.memory_space<vmem>>, %arg7: memref<256x128xf32, #tpu.memory_space<vmem>>) attributes {dimension_semantics = [#tpu.dimension_semantics<parallel>, #tpu.dimension_semantics<arbitrary>], iteration_bounds = array<i64: 1, 1>, scalar_prefetch = 0 : i64, scratch_operands = 1 : i64, tpu.core_type = #tpu.core_type<tc>, window_params = [{transform_indices = @transform_0, window_bounds = array<i64: 256, 256>}, {transform_indices = @transform_1, window_bounds = array<i64: 256, 128>}, {transform_indices = @transform_2, window_bounds = array<i64: 256, 1>}, {transform_indices = @transform_3, window_bounds = array<i64: 256, 128>}, {transform_indices = @transform_4, window_bounds = array<i64: 256, 128>}]} {
    %c0_i32 = arith.constant 0 : i32
    %0 = arith.cmpi eq, %arg1, %c0_i32 : i32
    %1 = arith.extui %0 : i1 to i32
    %c0_i32_0 = arith.constant 0 : i32
    %2 = arith.cmpi ne, %1, %c0_i32_0 : i32
    scf.if %2 {
      %cst_10 = arith.constant 0.000000e+00 : f32
      %12 = vector.broadcast %cst_10 : f32 to vector<256x128xf32>
      %c0_11 = arith.constant 0 : index
      %c0_12 = arith.constant 0 : index
      %13 = vector.load %arg7[%c0_11, %c0_12] : memref<256x128xf32, #tpu.memory_space<vmem>>, vector<256x128xf32>
      tpu.vector_store %arg7[%c0_11, %c0_12], %12 {strides = array<i32>} : memref<256x128xf32, #tpu.memory_space<vmem>>, vector<256x128xf32>,
    } else {
    }
    %c0 = arith.constant 0 : index
    %c0_1 = arith.constant 0 : index
    %3 = vector.load %arg7[%c0, %c0_1] : memref<256x128xf32, #tpu.memory_space<vmem>>, vector<256x128xf32>
    %c0_2 = arith.constant 0 : index
    %c0_3 = arith.constant 0 : index
    %4 = vector.load %arg2[%c0_2, %c0_3] : memref<256x256xbf16, #tpu.memory_space<vmem>>, vector<256x256xbf16>
    %c0_4 = arith.constant 0 : index
    %c0_5 = arith.constant 0 : index
    %5 = vector.load %arg3[%c0_4, %c0_5] : memref<256x128xbf16, #tpu.memory_space<vmem>>, vector<256x128xbf16>
    %cst = arith.constant dense<0.000000e+00> : vector<256x128xf32>
    %6 = tpu.matmul %4, %5, %cst {dimension_numbers = #tpu.dot_dimension_numbers<[1], [0], [0], [1], [0, 0, 1, 1], [], []>} : vector<256x256xbf16>, vector<256x128xbf16>, vector<256x128xf32> -> vector<256x128xf32>
    %7 = arith.addf %3, %6 : vector<256x128xf32>
    %c0_6 = arith.constant 0 : index
    %c0_7 = arith.constant 0 : index
    %8 = vector.load %arg7[%c0_6, %c0_7] : memref<256x128xf32, #tpu.memory_space<vmem>>, vector<256x128xf32>
    tpu.vector_store %arg7[%c0_6, %c0_7], %7 {strides = array<i32>} : memref<256x128xf32, #tpu.memory_space<vmem>>, vector<256x128xf32>,
    %c0_i32_8 = arith.constant 0 : i32
    %9 = arith.cmpi eq, %arg1, %c0_i32_8 : i32
    %10 = arith.extui %9 : i1 to i32
    %c0_i32_9 = arith.constant 0 : i32
    %11 = arith.cmpi ne, %10, %c0_i32_9 : i32
    scf.if %11 {
      %c0_10 = arith.constant 0 : index
      %c0_11 = arith.constant 0 : index
      %12 = vector.load %arg4[%c0_10, %c0_11] : memref<256x1xf32, #tpu.memory_space<vmem>>, vector<256x1xf32>
      %c0_12 = arith.constant 0 : index
      %c0_13 = arith.constant 0 : index
      %13 = vector.load %arg7[%c0_12, %c0_13] : memref<256x128xf32, #tpu.memory_space<vmem>>, vector<256x128xf32>
      %14 = vector.broadcast %12 : vector<256x1xf32> to vector<256x128xf32>
      %15 = arith.mulf %14, %13 : vector<256x128xf32>
      %c0_14 = arith.constant 0 : index
      %c0_15 = arith.constant 0 : index
      %16 = vector.load %arg5[%c0_14, %c0_15] : memref<256x128xf32, #tpu.memory_space<vmem>>, vector<256x128xf32>
      %17 = arith.addf %15, %16 : vector<256x128xf32>
      %c0_16 = arith.constant 0 : index
      %c0_17 = arith.constant 0 : index
      %18 = vector.load %arg6[%c0_16, %c0_17] : memref<256x128xf32, #tpu.memory_space<vmem>>, vector<256x128xf32>
      tpu.vector_store %arg6[%c0_16, %c0_17], %17 {strides = array<i32>} : memref<256x128xf32, #tpu.memory_space<vmem>>, vector<256x128xf32>,
    } else {
    }
    return
  }
  func.func @transform_0(%arg0: i32, %arg1: i32) -> (i32, i32) {
    %c0_i32 = arith.constant 0 : i32
    return %arg0, %arg1 : i32, i32
  }
  func.func @transform_1(%arg0: i32, %arg1: i32) -> (i32, i32) {
    %c0_i32 = arith.constant 0 : i32
    %c0_i32_0 = arith.constant 0 : i32
    return %arg1, %c0_i32 : i32, i32
  }
  func.func @transform_2(%arg0: i32, %arg1: i32) -> (i32, i32) {
    %c0_i32 = arith.constant 0 : i32
    %c0_i32_0 = arith.constant 0 : i32
    return %arg0, %c0_i32 : i32, i32
  }
  func.func @transform_3(%arg0: i32, %arg1: i32) -> (i32, i32) {
    %c0_i32 = arith.constant 0 : i32
    %c0_i32_0 = arith.constant 0 : i32
    return %arg0, %c0_i32 : i32, i32
  }
  func.func @transform_4(%arg0: i32, %arg1: i32) -> (i32, i32) {
    %c0_i32 = arith.constant 0 : i32
    %c0_i32_0 = arith.constant 0 : i32
    return %arg0, %c0_i32 : i32, i32
  }
}

</mosaic_0001>

<llo_original>
// kernel: _emp_gcn.2
$region0: #{_emp_gcn.2}
  #allocation0 [shape = 'u32[]', space=smem, size = 0x4, offset = 0x4, fixed_abs, tag = 'smem constant byte address 0x4 - core index']
  #allocation1 [shape = 'u32[144,128]{1,0:T(1,128)}', space=vmem, size = 0x12000, scoped, tag = 'internal scratch']
  #allocation2 [shape = 'f32[256,128]{1,0:T(8,128)}', space=vmem, size = 0x20000, scoped, tag = 'scratch operand']
  %s0 = inlined_call_operand.vmem [shape: bf16[256,256], index: 0, kind: input, shape index: {}]
  %s1 = inlined_call_operand.vmem [shape: bf16[256,128], index: 1, kind: input, shape index: {}]
  %s2 = inlined_call_operand.vmem [shape: f32[256,1], index: 2, kind: input, shape index: {}]
  %s3 = inlined_call_operand.vmem [shape: f32[256,128], index: 3, kind: input, shape index: {}]
  %s4 = inlined_call_operand.vmem [shape: f32[256,128], index: 4, kind: output, shape index: {}]
  %s5 = sld [smem:[#allocation0]]
  $region34: #{_emp_gcn.2} parent=0
    _
  %s7 = ssub.s32 1, %s5
  %s8 = scalar_select 0, %s7, %s5
  // Predicated region
  $region2: #{_emp_gcn.2} parent=0 // pred_check
    _
  $region3: #{_emp_gcn.2} parent=0 // pred_check_branch
    %10 = sbr.rel (0) target = $region5
  $region4: #{_emp_gcn.2} parent=0 // pred_region
    _
  $region5: #{_emp_gcn.2} parent=0 // pred_fallthru
    _
  // Predicated region
  $region6: #{_emp_gcn.2} parent=0 // pred_check
    _
  $region7: #{_emp_gcn.2} parent=0 // pred_check_branch
    %12 = sbr.rel (0) target = $region9
  $region8: #{_emp_gcn.2} parent=0 // pred_region
    _
  $region9: #{_emp_gcn.2} parent=0 // pred_fallthru
    _
  // Predicated region
  $region10: #{_emp_gcn.2} parent=0 // pred_check
    _
  $region11: #{_emp_gcn.2} parent=0 // pred_check_branch
    %14 = sbr.rel (0) target = $region13
  $region12: #{_emp_gcn.2} parent=0 // pred_region
    _
  $region13: #{_emp_gcn.2} parent=0 // pred_fallthru
    _
  // Predicated region
  $region14: #{_emp_gcn.2} parent=0 // pred_check
    _
  $region15: #{_emp_gcn.2} parent=0 // pred_check_branch
    %16 = sbr.rel (0) target = $region17
  $region16: #{_emp_gcn.2} parent=0 // pred_region
    _
  $region17: #{_emp_gcn.2} parent=0 // pred_fallthru
    _
  %p18 = scmp.eq.s32.totalorder 0, 0
  // Predicated region
  $region18: #{_emp_gcn.2} parent=0 // pred_check
    %p19 = pneg %p18
  $region19: #{_emp_gcn.2} parent=0 // pred_check_branch
    %21 = sbr.rel (%p19) target = $region21
  $region20: #{_emp_gcn.2} parent=0 // pred_region
    %22 = vst [vmem:[#allocation2] sm:$0xff] 0.0
    %23 = vst [vmem:[#allocation2 + $0x8] sm:$0xff] 0.0
    %24 = vst [vmem:[#allocation2 + $0x10] sm:$0xff] 0.0
    %25 = vst [vmem:[#allocation2 + $0x18] sm:$0xff] 0.0
    %26 = vst [vmem:[#allocation2 + $0x20] sm:$0xff] 0.0
    %27 = vst [vmem:[#allocation2 + $0x28] sm:$0xff] 0.0
    %28 = vst [vmem:[#allocation2 + $0x30] sm:$0xff] 0.0
    %29 = vst [vmem:[#allocation2 + $0x38] sm:$0xff] 0.0
    %30 = vst [vmem:[#allocation2 + $0x40] sm:$0xff] 0.0
    %31 = vst [vmem:[#allocation2 + $0x48] sm:$0xff] 0.0
    %32 = vst [vmem:[#allocation2 + $0x50] sm:$0xff] 0.0
    %33 = vst [vmem:[#allocation2 + $0x58] sm:$0xff] 0.0
    %34 = vst [vmem:[#allocation2 + $0x60] sm:$0xff] 0.0
    %35 = vst [vmem:[#allocation2 + $0x68] sm:$0xff] 0.0
    %36 = vst [vmem:[#allocation2 + $0x70] sm:$0xff] 0.0
    %37 = vst [vmem:[#allocation2 + $0x78] sm:$0xff] 0.0
    %38 = vst [vmem:[#allocation2 + $0x80] sm:$0xff] 0.0
    %39 = vst [vmem:[#allocation2 + $0x88] sm:$0xff] 0.0
    %40 = vst [vmem:[#allocation2 + $0x90] sm:$0xff] 0.0
    %41 = vst [vmem:[#allocation2 + $0x98] sm:$0xff] 0.0
    %42 = vst [vmem:[#allocation2 + $0xa0] sm:$0xff] 0.0
    %43 = vst [vmem:[#allocation2 + $0xa8] sm:$0xff] 0.0
    %44 = vst [vmem:[#allocation2 + $0xb0] sm:$0xff] 0.0
    %45 = vst [vmem:[#allocation2 + $0xb8] sm:$0xff] 0.0
    %46 = vst [vmem:[#allocation2 + $0xc0] sm:$0xff] 0.0
    %47 = vst [vmem:[#allocation2 + $0xc8] sm:$0xff] 0.0
    %48 = vst [vmem:[#allocation2 + $0xd0] sm:$0xff] 0.0
    %49 = vst [vmem:[#allocation2 + $0xd8] sm:$0xff] 0.0
    %50 = vst [vmem:[#allocation2 + $0xe0] sm:$0xff] 0.0
    %51 = vst [vmem:[#allocation2 + $0xe8] sm:$0xff] 0.0
    %52 = vst [vmem:[#allocation2 + $0xf0] sm:$0xff] 0.0
    %53 = vst [vmem:[#allocation2 + $0xf8] sm:$0xff] 0.0
  $region21: #{_emp_gcn.2} parent=0 // pred_fallthru
    _
  %v54 = vld [vmem:[#allocation2] sm:$0xff]
  %v55 = vld [vmem:[#allocation2 + $0x8] sm:$0xff]
  %v56 = vld [vmem:[#allocation2 + $0x10] sm:$0xff]
  %v57 = vld [vmem:[#allocation2 + $0x18] sm:$0xff]
  %v58 = vld [vmem:[#allocation2 + $0x20] sm:$0xff]
  %v59 = vld [vmem:[#allocation2 + $0x28] sm:$0xff]
  %v60 = vld [vmem:[#allocation2 + $0x30] sm:$0xff]
  %v61 = vld [vmem:[#allocation2 + $0x38] sm:$0xff]
  %v62 = vld [vmem:[#allocation2 + $0x40] sm:$0xff]
  %v63 = vld [vmem:[#allocation2 + $0x48] sm:$0xff]
  %v64 = vld [vmem:[#allocation2 + $0x50] sm:$0xff]
  %v65 = vld [vmem:[#allocation2 + $0x58] sm:$0xff]
  %v66 = vld [vmem:[#allocation2 + $0x60] sm:$0xff]
  %v67 = vld [vmem:[#allocation2 + $0x68] sm:$0xff]
  %v68 = vld [vmem:[#allocation2 + $0x70] sm:$0xff]
  %v69 = vld [vmem:[#allocation2 + $0x78] sm:$0xff]
  %v70 = vld [vmem:[#allocation2 + $0x80] sm:$0xff]
  %v71 = vld [vmem:[#allocation2 + $0x88] sm:$0xff]
  %v72 = vld [vmem:[#allocation2 + $0x90] sm:$0xff]
  %v73 = vld [vmem:[#allocation2 + $0x98] sm:$0xff]
  %v74 = vld [vmem:[#allocation2 + $0xa0] sm:$0xff]
  %v75 = vld [vmem:[#allocation2 + $0xa8] sm:$0xff]
  %v76 = vld [vmem:[#allocation2 + $0xb0] sm:$0xff]
  %v77 = vld [vmem:[#allocation2 + $0xb8] sm:$0xff]
  %v78 = vld [vmem:[#allocation2 + $0xc0] sm:$0xff]
  %v79 = vld [vmem:[#allocation2 + $0xc8] sm:$0xff]
  %v80 = vld [vmem:[#allocation2 + $0xd0] sm:$0xff]
  %v81 = vld [vmem:[#allocation2 + $0xd8] sm:$0xff]
  %v82 = vld [vmem:[#allocation2 + $0xe0] sm:$0xff]
  %v83 = vld [vmem:[#allocation2 + $0xe8] sm:$0xff]
  %v84 = vld [vmem:[#allocation2 + $0xf0] sm:$0xff]
  %v85 = vld [vmem:[#allocation2 + $0xf8] sm:$0xff]
  %v86 = vld [vmem:[%s0] sm:$0xff]
  %v87 = vld [vmem:[%s0 + $0x8] sm:$0xff]
  %v88 = vld [vmem:[%s0 + $0x10] sm:$0xff]
  %v89 = vld [vmem:[%s0 + $0x18] sm:$0xff]
  %v90 = vld [vmem:[%s0 + $0x20] sm:$0xff]
  %v91 = vld [vmem:[%s0 + $0x28] sm:$0xff]
  %v92 = vld [vmem:[%s0 + $0x30] sm:$0xff]
  %v93 = vld [vmem:[%s0 + $0x38] sm:$0xff]
  %v94 = vld [vmem:[%s0 + $0x40] sm:$0xff]
  %v95 = vld [vmem:[%s0 + $0x48] sm:$0xff]
  %v96 = vld [vmem:[%s0 + $0x50] sm:$0xff]
  %v97 = vld [vmem:[%s0 + $0x58] sm:$0xff]
  %v98 = vld [vmem:[%s0 + $0x60] sm:$0xff]
  %v99 = vld [vmem:[%s0 + $0x68] sm:$0xff]
  %v100 = vld [vmem:[%s0 + $0x70] sm:$0xff]
  %v101 = vld [vmem:[%s0 + $0x78] sm:$0xff]
  %v102 = vld [vmem:[%s0 + $0x80] sm:$0xff]
  %v103 = vld [vmem:[%s0 + $0x88] sm:$0xff]
  %v104 = vld [vmem:[%s0 + $0x90] sm:$0xff]
  %v105 = vld [vmem:[%s0 + $0x98] sm:$0xff]
  %v106 = vld [vmem:[%s0 + $0xa0] sm:$0xff]
  %v107 = vld [vmem:[%s0 + $0xa8] sm:$0xff]
  %v108 = vld [vmem:[%s0 + $0xb0] sm:$0xff]
  %v109 = vld [vmem:[%s0 + $0xb8] sm:$0xff]
  %v110 = vld [vmem:[%s0 + $0xc0] sm:$0xff]
  %v111 = vld [vmem:[%s0 + $0xc8] sm:$0xff]
  %v112 = vld [vmem:[%s0 + $0xd0] sm:$0xff]
  %v113 = vld [vmem:[%s0 + $0xd8] sm:$0xff]
  %v114 = vld [vmem:[%s0 + $0xe0] sm:$0xff]
  %v115 = vld [vmem:[%s0 + $0xe8] sm:$0xff]
  %v116 = vld [vmem:[%s0 + $0xf0] sm:$0xff]
  %v117 = vld [vmem:[%s0 + $0xf8] sm:$0xff]
  %v118 = vld [vmem:[%s1] sm:$0xf]
  %v119 = vld [vmem:[%s1 + $0x4] sm:$0xf]
  %v120 = vld [vmem:[%s1 + $0x8] sm:$0xf]
  %v121 = vld [vmem:[%s1 + $0xc] sm:$0xf]
  %v122 = vld [vmem:[%s1 + $0x10] sm:$0xf]
  %v123 = vld [vmem:[%s1 + $0x14] sm:$0xf]
  %v124 = vld [vmem:[%s1 + $0x18] sm:$0xf]
  %v125 = vld [vmem:[%s1 + $0x1c] sm:$0xf]
  %v126 = vld [vmem:[%s1 + $0x20] sm:$0xf]
  %v127 = vld [vmem:[%s1 + $0x24] sm:$0xf]
  %v128 = vld [vmem:[%s1 + $0x28] sm:$0xf]
  %v129 = vld [vmem:[%s1 + $0x2c] sm:$0xf]
  %v130 = vld [vmem:[%s1 + $0x30] sm:$0xf]
  %v131 = vld [vmem:[%s1 + $0x34] sm:$0xf]
  %v132 = vld [vmem:[%s1 + $0x38] sm:$0xf]
  %v133 = vld [vmem:[%s1 + $0x3c] sm:$0xf]
  %v134 = vld [vmem:[%s1 + $0x40] sm:$0xf]
  %v135 = vld [vmem:[%s1 + $0x44] sm:$0xf]
  %v136 = vld [vmem:[%s1 + $0x48] sm:$0xf]
  %v137 = vld [vmem:[%s1 + $0x4c] sm:$0xf]
  %v138 = vld [vmem:[%s1 + $0x50] sm:$0xf]
  %v139 = vld [vmem:[%s1 + $0x54] sm:$0xf]
  %v140 = vld [vmem:[%s1 + $0x58] sm:$0xf]
  %v141 = vld [vmem:[%s1 + $0x5c] sm:$0xf]
  %v142 = vld [vmem:[%s1 + $0x60] sm:$0xf]
  %v143 = vld [vmem:[%s1 + $0x64] sm:$0xf]
  %v144 = vld [vmem:[%s1 + $0x68] sm:$0xf]
  %v145 = vld [vmem:[%s1 + $0x6c] sm:$0xf]
  %v146 = vld [vmem:[%s1 + $0x70] sm:$0xf]
  %v147 = vld [vmem:[%s1 + $0x74] sm:$0xf]
  %v148 = vld [vmem:[%s1 + $0x78] sm:$0xf]
  %v149 = vld [vmem:[%s1 + $0x7c] sm:$0xf]
  %v182 = vunpack.c.l.b16 %v86
  %v183 = vunpack.c.h.b16 %v86
  %v184 = vunpack.c.l.b16 %v87
  %v185 = vunpack.c.h.b16 %v87
  %v186 = vunpack.c.l.b16 %v88
  %v187 = vunpack.c.h.b16 %v88
  %v188 = vunpack.c.l.b16 %v89
  %v189 = vunpack.c.h.b16 %v89
  %v190 = vunpack.c.l.b16 %v90
  %v191 = vunpack.c.h.b16 %v90
  %v192 = vunpack.c.l.b16 %v91
  %v193 = vunpack.c.h.b16 %v91
  %v194 = vunpack.c.l.b16 %v92
  %v195 = vunpack.c.h.b16 %v92
  %v196 = vunpack.c.l.b16 %v93
  %v197 = vunpack.c.h.b16 %v93
  %v198 = vunpack.c.l.b16 %v94
  %v199 = vunpack.c.h.b16 %v94
  %v200 = vunpack.c.l.b16 %v95
  %v201 = vunpack.c.h.b16 %v95
  %v202 = vunpack.c.l.b16 %v96
  %v203 = vunpack.c.h.b16 %v96
  %v204 = vunpack.c.l.b16 %v97
  %v205 = vunpack.c.h.b16 %v97
  %v206 = vunpack.c.l.b16 %v98
  %v207 = vunpack.c.h.b16 %v98
  %v208 = vunpack.c.l.b16 %v99
  %v209 = vunpack.c.h.b16 %v99
  %v210 = vunpack.c.l.b16 %v100
  %v211 = vunpack.c.h.b16 %v100
  %v212 = vunpack.c.l.b16 %v101
  %v213 = vunpack.c.h.b16 %v101
  %v214 = vunpack.c.l.b16 %v102
  %v215 = vunpack.c.h.b16 %v102
  %v216 = vunpack.c.l.b16 %v103
  %v217 = vunpack.c.h.b16 %v103
  %v218 = vunpack.c.l.b16 %v104
  %v219 = vunpack.c.h.b16 %v104
  %v220 = vunpack.c.l.b16 %v105
  %v221 = vunpack.c.h.b16 %v105
  %v222 = vunpack.c.l.b16 %v106
  %v223 = vunpack.c.h.b16 %v106
  %v224 = vunpack.c.l.b16 %v107
  %v225 = vunpack.c.h.b16 %v107
  %v226 = vunpack.c.l.b16 %v108
  %v227 = vunpack.c.h.b16 %v108
  %v228 = vunpack.c.l.b16 %v109
  %v229 = vunpack.c.h.b16 %v109
  %v230 = vunpack.c.l.b16 %v110
  %v231 = vunpack.c.h.b16 %v110
  %v232 = vunpack.c.l.b16 %v111
  %v233 = vunpack.c.h.b16 %v111
  %v234 = vunpack.c.l.b16 %v112
  %v235 = vunpack.c.h.b16 %v112
  %v236 = vunpack.c.l.b16 %v113
  %v237 = vunpack.c.h.b16 %v113
  %v238 = vunpack.c.l.b16 %v114
  %v239 = vunpack.c.h.b16 %v114
  %v240 = vunpack.c.l.b16 %v115
  %v241 = vunpack.c.h.b16 %v115
  %v242 = vunpack.c.l.b16 %v116
  %v243 = vunpack.c.h.b16 %v116
  %v244 = vunpack.c.l.b16 %v117
  %v245 = vunpack.c.h.b16 %v117
  %v246 = vpack.c.b16 %v184, %v182
  %v247 = vpack.c.b16 %v185, %v183
  %v248 = vpack.c.b16 %v188, %v186
  %v249 = vpack.c.b16 %v189, %v187
  %v250 = vpack.c.b16 %v192, %v190
  %v251 = vpack.c.b16 %v193, %v191
  %v252 = vpack.c.b16 %v196, %v194
  %v253 = vpack.c.b16 %v197, %v195
  %v254 = vpack.c.b16 %v200, %v198
  %v255 = vpack.c.b16 %v201, %v199
  %v256 = vpack.c.b16 %v204, %v202
  %v257 = vpack.c.b16 %v205, %v203
  %v258 = vpack.c.b16 %v208, %v206
  %v259 = vpack.c.b16 %v209, %v207
  %v260 = vpack.c.b16 %v212, %v210
  %v261 = vpack.c.b16 %v213, %v211
  %v262 = vpack.c.b16 %v216, %v214
  %v263 = vpack.c.b16 %v217, %v215
  %v264 = vpack.c.b16 %v220, %v218
  %v265 = vpack.c.b16 %v221, %v219
  %v266 = vpack.c.b16 %v224, %v222
  %v267 = vpack.c.b16 %v225, %v223
  %v268 = vpack.c.b16 %v228, %v226
  %v269 = vpack.c.b16 %v229, %v227
  %v270 = vpack.c.b16 %v232, %v230
  %v271 = vpack.c.b16 %v233, %v231
  %v272 = vpack.c.b16 %v236, %v234
  %v273 = vpack.c.b16 %v237, %v235
  %v274 = vpack.c.b16 %v240, %v238
  %v275 = vpack.c.b16 %v241, %v239
  %v276 = vpack.c.b16 %v244, %v242
  %v277 = vpack.c.b16 %v245, %v243
  %v342 = vunpack.c.l.b16 %v118
  %v343 = vunpack.c.l.b16 %v119
  %v344 = vunpack.c.l.b16 %v120
  %v345 = vunpack.c.l.b16 %v121
  %v346 = vunpack.c.l.b16 %v122
  %v347 = vunpack.c.l.b16 %v123
  %v348 = vunpack.c.l.b16 %v124
  %v349 = vunpack.c.l.b16 %v125
  %v350 = vunpack.c.l.b16 %v126
  %v351 = vunpack.c.l.b16 %v127
  %v352 = vunpack.c.l.b16 %v128
  %v353 = vunpack.c.l.b16 %v129
  %v354 = vunpack.c.l.b16 %v130
  %v355 = vunpack.c.l.b16 %v131
  %v356 = vunpack.c.l.b16 %v132
  %v357 = vunpack.c.l.b16 %v133
  %v358 = vunpack.c.l.b16 %v134
  %v359 = vunpack.c.l.b16 %v135
  %v360 = vunpack.c.l.b16 %v136
  %v361 = vunpack.c.l.b16 %v137
  %v362 = vunpack.c.l.b16 %v138
  %v363 = vunpack.c.l.b16 %v139
  %v364 = vunpack.c.l.b16 %v140
  %v365 = vunpack.c.l.b16 %v141
  %v366 = vunpack.c.l.b16 %v142
  %v367 = vunpack.c.l.b16 %v143
  %v368 = vunpack.c.l.b16 %v144
  %v369 = vunpack.c.l.b16 %v145
  %v370 = vunpack.c.l.b16 %v146
  %v371 = vunpack.c.l.b16 %v147
  %v372 = vunpack.c.l.b16 %v148
  %v373 = vunpack.c.l.b16 %v149
  %v374 = vpack.c.b16 %v343, %v342
  %v375 = vpack.c.b16 %v345, %v344
  %v376 = vpack.c.b16 %v347, %v346
  %v377 = vpack.c.b16 %v349, %v348
  %v378 = vpack.c.b16 %v351, %v350
  %v379 = vpack.c.b16 %v353, %v352
  %v380 = vpack.c.b16 %v355, %v354
  %v381 = vpack.c.b16 %v357, %v356
  %v382 = vpack.c.b16 %v359, %v358
  %v383 = vpack.c.b16 %v361, %v360
  %v384 = vpack.c.b16 %v363, %v362
  %v385 = vpack.c.b16 %v365, %v364
  %v386 = vpack.c.b16 %v367, %v366
  %v387 = vpack.c.b16 %v369, %v368
  %v388 = vpack.c.b16 %v371, %v370
  %v389 = vpack.c.b16 %v373, %v372
  %406 = vmatprep.subr.bf16.mxu0 0
  %407 = vmatpush1.bf16.msra.mxu0 %v381
  %408 = vmatprep.subr.bf16.mxu0 0
  %409 = vmatpush1.bf16.msra.mxu0 %v380
  %410 = vmatprep.subr.bf16.mxu0 0
  %411 = vmatpush1.bf16.msra.mxu0 %v379
  %412 = vmatprep.subr.bf16.mxu0 0
  %413 = vmatpush1.bf16.msra.mxu0 %v378
  %414 = vmatprep.subr.bf16.mxu0 0
  %415 = vmatpush1.bf16.msra.mxu0 %v377
  %416 = vmatprep.subr.bf16.mxu0 0
  %417 = vmatpush1.bf16.msra.mxu0 %v376
  %418 = vmatprep.subr.bf16.mxu0 0
  %419 = vmatpush1.bf16.msra.mxu0 %v375
  %420 = vmatprep.subr.bf16.mxu0 0
  %421 = vmatpush1.bf16.msra.mxu0 %v374
  %422 = vmatprep.subr.bf16.mxu0 0
  %423 = vmatpush2.bf16.msra.mxu0 %v389
  %424 = vmatprep.subr.bf16.mxu0 0
  %425 = vmatpush2.bf16.msra.mxu0 %v388
  %426 = vmatprep.subr.bf16.mxu0 0
  %427 = vmatpush2.bf16.msra.mxu0 %v387
  %428 = vmatprep.subr.bf16.mxu0 0
  %429 = vmatpush2.bf16.msra.mxu0 %v386
  %430 = vmatprep.subr.bf16.mxu0 0
  %431 = vmatpush2.bf16.msra.mxu0 %v385
  %432 = vmatprep.subr.bf16.mxu0 0
  %433 = vmatpush2.bf16.msra.mxu0 %v384
  %434 = vmatprep.subr.bf16.mxu0 0
  %435 = vmatpush2.bf16.msra.mxu0 %v383
  %436 = vmatprep.subr.bf16.mxu0 0
  %437 = vmatpush2.bf16.msra.mxu0 %v382
  %438 = vmatprep.mubr.bf16.mxu0 %v247
  %439 = vmatmul.mubr.bf16.gmra.mxu0 %v246
  %v440 = vpop.f32.mrf.mxu0
  %v441 = vadd.f32 0.0, %v440
  %v442 = vpop.f32.mrf.mxu0
  %v443 = vpop.f32.mrf.mxu0
  %v444 = vadd.f32 0.0, %v443
  %v445 = vpop.f32.mrf.mxu0
  %446 = vmatprep.mubr.bf16.mxu0 %v249
  %447 = vmatmul.mubr.bf16.gmra.mxu0 %v248
  %v448 = vpop.f32.mrf.mxu0
  %v449 = vadd.f32 0.0, %v448
  %v450 = vpop.f32.mrf.mxu0
  %v451 = vpop.f32.mrf.mxu0
  %v452 = vadd.f32 0.0, %v451
  %v453 = vpop.f32.mrf.mxu0
  %454 = vmatprep.mubr.bf16.mxu0 %v251
  %455 = vmatmul.mubr.bf16.gmra.mxu0 %v250
  %v456 = vpop.f32.mrf.mxu0
  %v457 = vadd.f32 0.0, %v456
  %v458 = vpop.f32.mrf.mxu0
  %v459 = vpop.f32.mrf.mxu0
  %v460 = vadd.f32 0.0, %v459
  %v461 = vpop.f32.mrf.mxu0
  %462 = vmatprep.mubr.bf16.mxu0 %v253
  %463 = vmatmul.mubr.bf16.gmra.mxu0 %v252
  %v464 = vpop.f32.mrf.mxu0
  %v465 = vadd.f32 0.0, %v464
  %v466 = vpop.f32.mrf.mxu0
  %v467 = vpop.f32.mrf.mxu0
  %v468 = vadd.f32 0.0, %v467
  %v469 = vpop.f32.mrf.mxu0
  %470 = vmatprep.mubr.bf16.mxu0 %v255
  %471 = vmatmul.mubr.bf16.gmra.mxu0 %v254
  %v472 = vpop.f32.mrf.mxu0
  %v473 = vadd.f32 0.0, %v472
  %v474 = vpop.f32.mrf.mxu0
  %v475 = vpop.f32.mrf.mxu0
  %v476 = vadd.f32 0.0, %v475
  %v477 = vpop.f32.mrf.mxu0
  %478 = vmatprep.mubr.bf16.mxu0 %v257
  %479 = vmatmul.mubr.bf16.gmra.mxu0 %v256
  %v480 = vpop.f32.mrf.mxu0
  %v481 = vadd.f32 0.0, %v480
  %v482 = vpop.f32.mrf.mxu0
  %v483 = vpop.f32.mrf.mxu0
  %v484 = vadd.f32 0.0, %v483
  %v485 = vpop.f32.mrf.mxu0
  %486 = vmatprep.mubr.bf16.mxu0 %v259
  %487 = vmatmul.mubr.bf16.gmra.mxu0 %v258
  %v488 = vpop.f32.mrf.mxu0
  %v489 = vadd.f32 0.0, %v488
  %v490 = vpop.f32.mrf.mxu0
  %v491 = vpop.f32.mrf.mxu0
  %v492 = vadd.f32 0.0, %v491
  %v493 = vpop.f32.mrf.mxu0
  %494 = vmatprep.mubr.bf16.mxu0 %v261
  %495 = vmatmul.mubr.bf16.gmra.mxu0 %v260
  %v496 = vpop.f32.mrf.mxu0
  %v497 = vadd.f32 0.0, %v496
  %v498 = vpop.f32.mrf.mxu0
  %v499 = vpop.f32.mrf.mxu0
  %v500 = vadd.f32 0.0, %v499
  %v501 = vpop.f32.mrf.mxu0
  %502 = vmatprep.mubr.bf16.mxu0 %v263
  %503 = vmatmul.mubr.bf16.gmra.mxu0 %v262
  %v504 = vpop.f32.mrf.mxu0
  %v505 = vadd.f32 0.0, %v504
  %v506 = vpop.f32.mrf.mxu0
  %v507 = vpop.f32.mrf.mxu0
  %v508 = vadd.f32 0.0, %v507
  %v509 = vpop.f32.mrf.mxu0
  %510 = vmatprep.mubr.bf16.mxu0 %v265
  %511 = vmatmul.mubr.bf16.gmra.mxu0 %v264
  %v512 = vpop.f32.mrf.mxu0
  %v513 = vadd.f32 0.0, %v512
  %v514 = vpop.f32.mrf.mxu0
  %v515 = vpop.f32.mrf.mxu0
  %v516 = vadd.f32 0.0, %v515
  %v517 = vpop.f32.mrf.mxu0
  %518 = vmatprep.mubr.bf16.mxu0 %v267
  %519 = vmatmul.mubr.bf16.gmra.mxu0 %v266
  %v520 = vpop.f32.mrf.mxu0
  %v521 = vadd.f32 0.0, %v520
  %v522 = vpop.f32.mrf.mxu0
  %v523 = vpop.f32.mrf.mxu0
  %v524 = vadd.f32 0.0, %v523
  %v525 = vpop.f32.mrf.mxu0
  %526 = vmatprep.mubr.bf16.mxu0 %v269
  %527 = vmatmul.mubr.bf16.gmra.mxu0 %v268
  %v528 = vpop.f32.mrf.mxu0
  %v529 = vadd.f32 0.0, %v528
  %v530 = vpop.f32.mrf.mxu0
  %v531 = vpop.f32.mrf.mxu0
  %v532 = vadd.f32 0.0, %v531
  %v533 = vpop.f32.mrf.mxu0
  %534 = vmatprep.mubr.bf16.mxu0 %v271
  %535 = vmatmul.mubr.bf16.gmra.mxu0 %v270
  %v536 = vpop.f32.mrf.mxu0
  %v537 = vadd.f32 0.0, %v536
  %v538 = vpop.f32.mrf.mxu0
  %v539 = vpop.f32.mrf.mxu0
  %v540 = vadd.f32 0.0, %v539
  %v541 = vpop.f32.mrf.mxu0
  %542 = vmatprep.mubr.bf16.mxu0 %v273
  %543 = vmatmul.mubr.bf16.gmra.mxu0 %v272
  %v544 = vpop.f32.mrf.mxu0
  %v545 = vadd.f32 0.0, %v544
  %v546 = vpop.f32.mrf.mxu0
  %v547 = vpop.f32.mrf.mxu0
  %v548 = vadd.f32 0.0, %v547
  %v549 = vpop.f32.mrf.mxu0
  %550 = vmatprep.mubr.bf16.mxu0 %v275
  %551 = vmatmul.mubr.bf16.gmra.mxu0 %v274
  %v552 = vpop.f32.mrf.mxu0
  %v553 = vadd.f32 0.0, %v552
  %v554 = vpop.f32.mrf.mxu0
  %v555 = vpop.f32.mrf.mxu0
  %v556 = vadd.f32 0.0, %v555
  %v557 = vpop.f32.mrf.mxu0
  %558 = vmatprep.mubr.bf16.mxu0 %v277
  %559 = vmatmul.mubr.bf16.gmra.mxu0 %v276
  %v560 = vpop.f32.mrf.mxu0
  %v561 = vadd.f32 0.0, %v560
  %v562 = vpop.f32.mrf.mxu0
  %v563 = vpop.f32.mrf.mxu0
  %v564 = vadd.f32 0.0, %v563
  %v565 = vpop.f32.mrf.mxu0
  %566 = vdwg.mxu0
  %v567 = vadd.f32 %v54, %v441
  %v568 = vadd.f32 %v55, %v444
  %v569 = vadd.f32 %v56, %v449
  %v570 = vadd.f32 %v57, %v452
  %v571 = vadd.f32 %v58, %v457
  %v572 = vadd.f32 %v59, %v460
  %v573 = vadd.f32 %v60, %v465
  %v574 = vadd.f32 %v61, %v468
  %v575 = vadd.f32 %v62, %v473
  %v576 = vadd.f32 %v63, %v476
  %v577 = vadd.f32 %v64, %v481
  %v578 = vadd.f32 %v65, %v484
  %v579 = vadd.f32 %v66, %v489
  %v580 = vadd.f32 %v67, %v492
  %v581 = vadd.f32 %v68, %v497
  %v582 = vadd.f32 %v69, %v500
  %v583 = vadd.f32 %v70, %v505
  %v584 = vadd.f32 %v71, %v508
  %v585 = vadd.f32 %v72, %v513
  %v586 = vadd.f32 %v73, %v516
  %v587 = vadd.f32 %v74, %v521
  %v588 = vadd.f32 %v75, %v524
  %v589 = vadd.f32 %v76, %v529
  %v590 = vadd.f32 %v77, %v532
  %v591 = vadd.f32 %v78, %v537
  %v592 = vadd.f32 %v79, %v540
  %v593 = vadd.f32 %v80, %v545
  %v594 = vadd.f32 %v81, %v548
  %v595 = vadd.f32 %v82, %v553
  %v596 = vadd.f32 %v83, %v556
  %v597 = vadd.f32 %v84, %v561
  %v598 = vadd.f32 %v85, %v564
  %599 = vst [vmem:[#allocation2] sm:$0xff] %v567
  %600 = vst [vmem:[#allocation2 + $0x8] sm:$0xff] %v568
  %601 = vst [vmem:[#allocation2 + $0x10] sm:$0xff] %v569
  %602 = vst [vmem:[#allocation2 + $0x18] sm:$0xff] %v570
  %603 = vst [vmem:[#allocation2 + $0x20] sm:$0xff] %v571
  %604 = vst [vmem:[#allocation2 + $0x28] sm:$0xff] %v572
  %605 = vst [vmem:[#allocation2 + $0x30] sm:$0xff] %v573
  %606 = vst [vmem:[#allocation2 + $0x38] sm:$0xff] %v574
  %607 = vst [vmem:[#allocation2 + $0x40] sm:$0xff] %v575
  %608 = vst [vmem:[#allocation2 + $0x48] sm:$0xff] %v576
  %609 = vst [vmem:[#allocation2 + $0x50] sm:$0xff] %v577
  %610 = vst [vmem:[#allocation2 + $0x58] sm:$0xff] %v578
  %611 = vst [vmem:[#allocation2 + $0x60] sm:$0xff] %v579
  %612 = vst [vmem:[#allocation2 + $0x68] sm:$0xff] %v580
  %613 = vst [vmem:[#allocation2 + $0x70] sm:$0xff] %v581
  %614 = vst [vmem:[#allocation2 + $0x78] sm:$0xff] %v582
  %615 = vst [vmem:[#allocation2 + $0x80] sm:$0xff] %v583
  %616 = vst [vmem:[#allocation2 + $0x88] sm:$0xff] %v584
  %617 = vst [vmem:[#allocation2 + $0x90] sm:$0xff] %v585
  %618 = vst [vmem:[#allocation2 + $0x98] sm:$0xff] %v586
  %619 = vst [vmem:[#allocation2 + $0xa0] sm:$0xff] %v587
  %620 = vst [vmem:[#allocation2 + $0xa8] sm:$0xff] %v588
  %621 = vst [vmem:[#allocation2 + $0xb0] sm:$0xff] %v589
  %622 = vst [vmem:[#allocation2 + $0xb8] sm:$0xff] %v590
  %623 = vst [vmem:[#allocation2 + $0xc0] sm:$0xff] %v591
  %624 = vst [vmem:[#allocation2 + $0xc8] sm:$0xff] %v592
  %625 = vst [vmem:[#allocation2 + $0xd0] sm:$0xff] %v593
  %626 = vst [vmem:[#allocation2 + $0xd8] sm:$0xff] %v594
  %627 = vst [vmem:[#allocation2 + $0xe0] sm:$0xff] %v595
  %628 = vst [vmem:[#allocation2 + $0xe8] sm:$0xff] %v596
  %629 = vst [vmem:[#allocation2 + $0xf0] sm:$0xff] %v597
  %630 = vst [vmem:[#allocation2 + $0xf8] sm:$0xff] %v598
  // Predicated region
  $region22: #{_emp_gcn.2} parent=0 // pred_check
    %p631 = pneg %p18
  $region23: #{_emp_gcn.2} parent=0 // pred_check_branch
    %633 = sbr.rel (%p631) target = $region25
  $region24: #{_emp_gcn.2} parent=0 // pred_region
    %v634 = vld [vmem:[%s2] sm:$0xff]
    %v635 = vld [vmem:[%s2 + $0x8] sm:$0xff]
    %v636 = vld [vmem:[%s2 + $0x10] sm:$0xff]
    %v637 = vld [vmem:[%s2 + $0x18] sm:$0xff]
    %v638 = vld [vmem:[%s2 + $0x20] sm:$0xff]
    %v639 = vld [vmem:[%s2 + $0x28] sm:$0xff]
    %v640 = vld [vmem:[%s2 + $0x30] sm:$0xff]
    %v641 = vld [vmem:[%s2 + $0x38] sm:$0xff]
    %v642 = vld [vmem:[%s2 + $0x40] sm:$0xff]
    %v643 = vld [vmem:[%s2 + $0x48] sm:$0xff]
    %v644 = vld [vmem:[%s2 + $0x50] sm:$0xff]
    %v645 = vld [vmem:[%s2 + $0x58] sm:$0xff]
    %v646 = vld [vmem:[%s2 + $0x60] sm:$0xff]
    %v647 = vld [vmem:[%s2 + $0x68] sm:$0xff]
    %v648 = vld [vmem:[%s2 + $0x70] sm:$0xff]
    %v649 = vld [vmem:[%s2 + $0x78] sm:$0xff]
    %v650 = vld [vmem:[%s2 + $0x80] sm:$0xff]
    %v651 = vld [vmem:[%s2 + $0x88] sm:$0xff]
    %v652 = vld [vmem:[%s2 + $0x90] sm:$0xff]
    %v653 = vld [vmem:[%s2 + $0x98] sm:$0xff]
    %v654 = vld [vmem:[%s2 + $0xa0] sm:$0xff]
    %v655 = vld [vmem:[%s2 + $0xa8] sm:$0xff]
    %v656 = vld [vmem:[%s2 + $0xb0] sm:$0xff]
    %v657 = vld [vmem:[%s2 + $0xb8] sm:$0xff]
    %v658 = vld [vmem:[%s2 + $0xc0] sm:$0xff]
    %v659 = vld [vmem:[%s2 + $0xc8] sm:$0xff]
    %v660 = vld [vmem:[%s2 + $0xd0] sm:$0xff]
    %v661 = vld [vmem:[%s2 + $0xd8] sm:$0xff]
    %v662 = vld [vmem:[%s2 + $0xe0] sm:$0xff]
    %v663 = vld [vmem:[%s2 + $0xe8] sm:$0xff]
    %v664 = vld [vmem:[%s2 + $0xf0] sm:$0xff]
    %v665 = vld [vmem:[%s2 + $0xf8] sm:$0xff]
    %v666 = vld [vmem:[#allocation2] sm:$0xff]
    %v667 = vld [vmem:[#allocation2 + $0x8] sm:$0xff]
    %v668 = vld [vmem:[#allocation2 + $0x10] sm:$0xff]
    %v669 = vld [vmem:[#allocation2 + $0x18] sm:$0xff]
    %v670 = vld [vmem:[#allocation2 + $0x20] sm:$0xff]
    %v671 = vld [vmem:[#allocation2 + $0x28] sm:$0xff]
    %v672 = vld [vmem:[#allocation2 + $0x30] sm:$0xff]
    %v673 = vld [vmem:[#allocation2 + $0x38] sm:$0xff]
    %v674 = vld [vmem:[#allocation2 + $0x40] sm:$0xff]
    %v675 = vld [vmem:[#allocation2 + $0x48] sm:$0xff]
    %v676 = vld [vmem:[#allocation2 + $0x50] sm:$0xff]
    %v677 = vld [vmem:[#allocation2 + $0x58] sm:$0xff]
    %v678 = vld [vmem:[#allocation2 + $0x60] sm:$0xff]
    %v679 = vld [vmem:[#allocation2 + $0x68] sm:$0xff]
    %v680 = vld [vmem:[#allocation2 + $0x70] sm:$0xff]
    %v681 = vld [vmem:[#allocation2 + $0x78] sm:$0xff]
    %v682 = vld [vmem:[#allocation2 + $0x80] sm:$0xff]
    %v683 = vld [vmem:[#allocation2 + $0x88] sm:$0xff]
    %v684 = vld [vmem:[#allocation2 + $0x90] sm:$0xff]
    %v685 = vld [vmem:[#allocation2 + $0x98] sm:$0xff]
    %v686 = vld [vmem:[#allocation2 + $0xa0] sm:$0xff]
    %v687 = vld [vmem:[#allocation2 + $0xa8] sm:$0xff]
    %v688 = vld [vmem:[#allocation2 + $0xb0] sm:$0xff]
    %v689 = vld [vmem:[#allocation2 + $0xb8] sm:$0xff]
    %v690 = vld [vmem:[#allocation2 + $0xc0] sm:$0xff]
    %v691 = vld [vmem:[#allocation2 + $0xc8] sm:$0xff]
    %v692 = vld [vmem:[#allocation2 + $0xd0] sm:$0xff]
    %v693 = vld [vmem:[#allocation2 + $0xd8] sm:$0xff]
    %v694 = vld [vmem:[#allocation2 + $0xe0] sm:$0xff]
    %v695 = vld [vmem:[#allocation2 + $0xe8] sm:$0xff]
    %v696 = vld [vmem:[#allocation2 + $0xf0] sm:$0xff]
    %v697 = vld [vmem:[#allocation2 + $0xf8] sm:$0xff]
    %699 = vset.pattern.permute.xlu0 0
    %700 = vperm.xlu0 %699, %v634
    %v701 = vpop.permute.xlu0 %700
    %704 = vset.pattern.permute.xlu0 0
    %705 = vperm.xlu0 %704, %v635
    %v706 = vpop.permute.xlu0 %705
    %709 = vset.pattern.permute.xlu0 0
    %710 = vperm.xlu0 %709, %v636
    %v711 = vpop.permute.xlu0 %710
    %714 = vset.pattern.permute.xlu0 0
    %715 = vperm.xlu0 %714, %v637
    %v716 = vpop.permute.xlu0 %715
    %719 = vset.pattern.permute.xlu0 0
    %720 = vperm.xlu0 %719, %v638
    %v721 = vpop.permute.xlu0 %720
    %724 = vset.pattern.permute.xlu0 0
    %725 = vperm.xlu0 %724, %v639
    %v726 = vpop.permute.xlu0 %725
    %729 = vset.pattern.permute.xlu0 0
    %730 = vperm.xlu0 %729, %v640
    %v731 = vpop.permute.xlu0 %730
    %734 = vset.pattern.permute.xlu0 0
    %735 = vperm.xlu0 %734, %v641
    %v736 = vpop.permute.xlu0 %735
    %739 = vset.pattern.permute.xlu0 0
    %740 = vperm.xlu0 %739, %v642
    %v741 = vpop.permute.xlu0 %740
    %744 = vset.pattern.permute.xlu0 0
    %745 = vperm.xlu0 %744, %v643
    %v746 = vpop.permute.xlu0 %745
    %749 = vset.pattern.permute.xlu0 0
    %750 = vperm.xlu0 %749, %v644
    %v751 = vpop.permute.xlu0 %750
    %754 = vset.pattern.permute.xlu0 0
    %755 = vperm.xlu0 %754, %v645
    %v756 = vpop.permute.xlu0 %755
    %759 = vset.pattern.permute.xlu0 0
    %760 = vperm.xlu0 %759, %v646
    %v761 = vpop.permute.xlu0 %760
    %764 = vset.pattern.permute.xlu0 0
    %765 = vperm.xlu0 %764, %v647
    %v766 = vpop.permute.xlu0 %765
    %769 = vset.pattern.permute.xlu0 0
    %770 = vperm.xlu0 %769, %v648
    %v771 = vpop.permute.xlu0 %770
    %774 = vset.pattern.permute.xlu0 0
    %775 = vperm.xlu0 %774, %v649
    %v776 = vpop.permute.xlu0 %775
    %779 = vset.pattern.permute.xlu0 0
    %780 = vperm.xlu0 %779, %v650
    %v781 = vpop.permute.xlu0 %780
    %784 = vset.pattern.permute.xlu0 0
    %785 = vperm.xlu0 %784, %v651
    %v786 = vpop.permute.xlu0 %785
    %789 = vset.pattern.permute.xlu0 0
    %790 = vperm.xlu0 %789, %v652
    %v791 = vpop.permute.xlu0 %790
    %794 = vset.pattern.permute.xlu0 0
    %795 = vperm.xlu0 %794, %v653
    %v796 = vpop.permute.xlu0 %795
    %799 = vset.pattern.permute.xlu0 0
    %800 = vperm.xlu0 %799, %v654
    %v801 = vpop.permute.xlu0 %800
    %804 = vset.pattern.permute.xlu0 0
    %805 = vperm.xlu0 %804, %v655
    %v806 = vpop.permute.xlu0 %805
    %809 = vset.pattern.permute.xlu0 0
    %810 = vperm.xlu0 %809, %v656
    %v811 = vpop.permute.xlu0 %810
    %814 = vset.pattern.permute.xlu0 0
    %815 = vperm.xlu0 %814, %v657
    %v816 = vpop.permute.xlu0 %815
    %819 = vset.pattern.permute.xlu0 0
    %820 = vperm.xlu0 %819, %v658
    %v821 = vpop.permute.xlu0 %820
    %824 = vset.pattern.permute.xlu0 0
    %825 = vperm.xlu0 %824, %v659
    %v826 = vpop.permute.xlu0 %825
    %829 = vset.pattern.permute.xlu0 0
    %830 = vperm.xlu0 %829, %v660
    %v831 = vpop.permute.xlu0 %830
    %834 = vset.pattern.permute.xlu0 0
    %835 = vperm.xlu0 %834, %v661
    %v836 = vpop.permute.xlu0 %835
    %839 = vset.pattern.permute.xlu0 0
    %840 = vperm.xlu0 %839, %v662
    %v841 = vpop.permute.xlu0 %840
    %844 = vset.pattern.permute.xlu0 0
    %845 = vperm.xlu0 %844, %v663
    %v846 = vpop.permute.xlu0 %845
    %849 = vset.pattern.permute.xlu0 0
    %850 = vperm.xlu0 %849, %v664
    %v851 = vpop.permute.xlu0 %850
    %854 = vset.pattern.permute.xlu0 0
    %855 = vperm.xlu0 %854, %v665
    %v856 = vpop.permute.xlu0 %855
    %v858 = vmul.f32 %v701, %v666
    %v859 = vmul.f32 %v706, %v667
    %v860 = vmul.f32 %v711, %v668
    %v861 = vmul.f32 %v716, %v669
    %v862 = vmul.f32 %v721, %v670
    %v863 = vmul.f32 %v726, %v671
    %v864 = vmul.f32 %v731, %v672
    %v865 = vmul.f32 %v736, %v673
    %v866 = vmul.f32 %v741, %v674
    %v867 = vmul.f32 %v746, %v675
    %v868 = vmul.f32 %v751, %v676
    %v869 = vmul.f32 %v756, %v677
    %v870 = vmul.f32 %v761, %v678
    %v871 = vmul.f32 %v766, %v679
    %v872 = vmul.f32 %v771, %v680
    %v873 = vmul.f32 %v776, %v681
    %v874 = vmul.f32 %v781, %v682
    %v875 = vmul.f32 %v786, %v683
    %v876 = vmul.f32 %v791, %v684
    %v877 = vmul.f32 %v796, %v685
    %v878 = vmul.f32 %v801, %v686
    %v879 = vmul.f32 %v806, %v687
    %v880 = vmul.f32 %v811, %v688
    %v881 = vmul.f32 %v816, %v689
    %v882 = vmul.f32 %v821, %v690
    %v883 = vmul.f32 %v826, %v691
    %v884 = vmul.f32 %v831, %v692
    %v885 = vmul.f32 %v836, %v693
    %v886 = vmul.f32 %v841, %v694
    %v887 = vmul.f32 %v846, %v695
    %v888 = vmul.f32 %v851, %v696
    %v889 = vmul.f32 %v856, %v697
    %v890 = vld [vmem:[%s3] sm:$0xff]
    %v891 = vld [vmem:[%s3 + $0x8] sm:$0xff]
    %v892 = vld [vmem:[%s3 + $0x10] sm:$0xff]
    %v893 = vld [vmem:[%s3 + $0x18] sm:$0xff]
    %v894 = vld [vmem:[%s3 + $0x20] sm:$0xff]
    %v895 = vld [vmem:[%s3 + $0x28] sm:$0xff]
    %v896 = vld [vmem:[%s3 + $0x30] sm:$0xff]
    %v897 = vld [vmem:[%s3 + $0x38] sm:$0xff]
    %v898 = vld [vmem:[%s3 + $0x40] sm:$0xff]
    %v899 = vld [vmem:[%s3 + $0x48] sm:$0xff]
    %v900 = vld [vmem:[%s3 + $0x50] sm:$0xff]
    %v901 = vld [vmem:[%s3 + $0x58] sm:$0xff]
    %v902 = vld [vmem:[%s3 + $0x60] sm:$0xff]
    %v903 = vld [vmem:[%s3 + $0x68] sm:$0xff]
    %v904 = vld [vmem:[%s3 + $0x70] sm:$0xff]
    %v905 = vld [vmem:[%s3 + $0x78] sm:$0xff]
    %v906 = vld [vmem:[%s3 + $0x80] sm:$0xff]
    %v907 = vld [vmem:[%s3 + $0x88] sm:$0xff]
    %v908 = vld [vmem:[%s3 + $0x90] sm:$0xff]
    %v909 = vld [vmem:[%s3 + $0x98] sm:$0xff]
    %v910 = vld [vmem:[%s3 + $0xa0] sm:$0xff]
    %v911 = vld [vmem:[%s3 + $0xa8] sm:$0xff]
    %v912 = vld [vmem:[%s3 + $0xb0] sm:$0xff]
    %v913 = vld [vmem:[%s3 + $0xb8] sm:$0xff]
    %v914 = vld [vmem:[%s3 + $0xc0] sm:$0xff]
    %v915 = vld [vmem:[%s3 + $0xc8] sm:$0xff]
    %v916 = vld [vmem:[%s3 + $0xd0] sm:$0xff]
    %v917 = vld [vmem:[%s3 + $0xd8] sm:$0xff]
    %v918 = vld [vmem:[%s3 + $0xe0] sm:$0xff]
    %v919 = vld [vmem:[%s3 + $0xe8] sm:$0xff]
    %v920 = vld [vmem:[%s3 + $0xf0] sm:$0xff]
    %v921 = vld [vmem:[%s3 + $0xf8] sm:$0xff]
    %v922 = vadd.f32 %v858, %v890
    %v923 = vadd.f32 %v859, %v891
    %v924 = vadd.f32 %v860, %v892
    %v925 = vadd.f32 %v861, %v893
    %v926 = vadd.f32 %v862, %v894
    %v927 = vadd.f32 %v863, %v895
    %v928 = vadd.f32 %v864, %v896
    %v929 = vadd.f32 %v865, %v897
    %v930 = vadd.f32 %v866, %v898
    %v931 = vadd.f32 %v867, %v899
    %v932 = vadd.f32 %v868, %v900
    %v933 = vadd.f32 %v869, %v901
    %v934 = vadd.f32 %v870, %v902
    %v935 = vadd.f32 %v871, %v903
    %v936 = vadd.f32 %v872, %v904
    %v937 = vadd.f32 %v873, %v905
    %v938 = vadd.f32 %v874, %v906
    %v939 = vadd.f32 %v875, %v907
    %v940 = vadd.f32 %v876, %v908
    %v941 = vadd.f32 %v877, %v909
    %v942 = vadd.f32 %v878, %v910
    %v943 = vadd.f32 %v879, %v911
    %v944 = vadd.f32 %v880, %v912
    %v945 = vadd.f32 %v881, %v913
    %v946 = vadd.f32 %v882, %v914
    %v947 = vadd.f32 %v883, %v915
    %v948 = vadd.f32 %v884, %v916
    %v949 = vadd.f32 %v885, %v917
    %v950 = vadd.f32 %v886, %v918
    %v951 = vadd.f32 %v887, %v919
    %v952 = vadd.f32 %v888, %v920
    %v953 = vadd.f32 %v889, %v921
    %v954 = vmax.f32 %v922, 0.0
    %v955 = vmax.f32 %v923, 0.0
    %v956 = vmax.f32 %v924, 0.0
    %v957 = vmax.f32 %v925, 0.0
    %v958 = vmax.f32 %v926, 0.0
    %v959 = vmax.f32 %v927, 0.0
    %v960 = vmax.f32 %v928, 0.0
    %v961 = vmax.f32 %v929, 0.0
    %v962 = vmax.f32 %v930, 0.0
    %v963 = vmax.f32 %v931, 0.0
    %v964 = vmax.f32 %v932, 0.0
    %v965 = vmax.f32 %v933, 0.0
    %v966 = vmax.f32 %v934, 0.0
    %v967 = vmax.f32 %v935, 0.0
    %v968 = vmax.f32 %v936, 0.0
    %v969 = vmax.f32 %v937, 0.0
    %v970 = vmax.f32 %v938, 0.0
    %v971 = vmax.f32 %v939, 0.0
    %v972 = vmax.f32 %v940, 0.0
    %v973 = vmax.f32 %v941, 0.0
    %v974 = vmax.f32 %v942, 0.0
    %v975 = vmax.f32 %v943, 0.0
    %v976 = vmax.f32 %v944, 0.0
    %v977 = vmax.f32 %v945, 0.0
    %v978 = vmax.f32 %v946, 0.0
    %v979 = vmax.f32 %v947, 0.0
    %v980 = vmax.f32 %v948, 0.0
    %v981 = vmax.f32 %v949, 0.0
    %v982 = vmax.f32 %v950, 0.0
    %v983 = vmax.f32 %v951, 0.0
    %v984 = vmax.f32 %v952, 0.0
    %v985 = vmax.f32 %v953, 0.0
    %986 = vst [vmem:[%s4] sm:$0xff] %v954
    %987 = vst [vmem:[%s4 + $0x8] sm:$0xff] %v955
    %988 = vst [vmem:[%s4 + $0x10] sm:$0xff] %v956
    %989 = vst [vmem:[%s4 + $0x18] sm:$0xff] %v957
    %990 = vst [vmem:[%s4 + $0x20] sm:$0xff] %v958
    %991 = vst [vmem:[%s4 + $0x28] sm:$0xff] %v959
    %992 = vst [vmem:[%s4 + $0x30] sm:$0xff] %v960
    %993 = vst [vmem:[%s4 + $0x38] sm:$0xff] %v961
    %994 = vst [vmem:[%s4 + $0x40] sm:$0xff] %v962
    %995 = vst [vmem:[%s4 + $0x48] sm:$0xff] %v963
    %996 = vst [vmem:[%s4 + $0x50] sm:$0xff] %v964
    %997 = vst [vmem:[%s4 + $0x58] sm:$0xff] %v965
    %998 = vst [vmem:[%s4 + $0x60] sm:$0xff] %v966
    %999 = vst [vmem:[%s4 + $0x68] sm:$0xff] %v967
    %1000 = vst [vmem:[%s4 + $0x70] sm:$0xff] %v968
    %1001 = vst [vmem:[%s4 + $0x78] sm:$0xff] %v969
    %1002 = vst [vmem:[%s4 + $0x80] sm:$0xff] %v970
    %1003 = vst [vmem:[%s4 + $0x88] sm:$0xff] %v971
    %1004 = vst [vmem:[%s4 + $0x90] sm:$0xff] %v972
    %1005 = vst [vmem:[%s4 + $0x98] sm:$0xff] %v973
    %1006 = vst [vmem:[%s4 + $0xa0] sm:$0xff] %v974
    %1007 = vst [vmem:[%s4 + $0xa8] sm:$0xff] %v975
    %1008 = vst [vmem:[%s4 + $0xb0] sm:$0xff] %v976
    %1009 = vst [vmem:[%s4 + $0xb8] sm:$0xff] %v977
    %1010 = vst [vmem:[%s4 + $0xc0] sm:$0xff] %v978
    %1011 = vst [vmem:[%s4 + $0xc8] sm:$0xff] %v979
    %1012 = vst [vmem:[%s4 + $0xd0] sm:$0xff] %v980
    %1013 = vst [vmem:[%s4 + $0xd8] sm:$0xff] %v981
    %1014 = vst [vmem:[%s4 + $0xe0] sm:$0xff] %v982
    %1015 = vst [vmem:[%s4 + $0xe8] sm:$0xff] %v983
    %1016 = vst [vmem:[%s4 + $0xf0] sm:$0xff] %v984
    %1017 = vst [vmem:[%s4 + $0xf8] sm:$0xff] %v985
  $region25: #{_emp_gcn.2} parent=0 // pred_fallthru
    _
  // Predicated region
  $region26: #{_emp_gcn.2} parent=0 // pred_check
    _
  $region27: #{_emp_gcn.2} parent=0 // pred_check_branch
    %1019 = sbr.rel (0) target = $region29
  $region28: #{_emp_gcn.2} parent=0 // pred_region
    _
  $region29: #{_emp_gcn.2} parent=0 // pred_fallthru
    _
  // Predicated region
  $region30: #{_emp_gcn.2} parent=0 // pred_check
    _
  $region31: #{_emp_gcn.2} parent=0 // pred_check_branch
    %1021 = sbr.rel (0) target = $region33
  $region32: #{_emp_gcn.2} parent=0 // pred_region
    _
  $region33: #{_emp_gcn.2} parent=0 // pred_fallthru
    _

// kernel: _emp_gcn.3
$region0: #{_emp_gcn.3}
  #allocation0 [shape = 'u32[]', space=smem, size = 0x4, offset = 0x4, fixed_abs, tag = 'smem constant byte address 0x4 - core index']
  #allocation1 [shape = 'u32[144,128]{1,0:T(1,128)}', space=vmem, size = 0x12000, scoped, tag = 'internal scratch']
  #allocation2 [shape = 'f32[256,128]{1,0:T(8,128)}', space=vmem, size = 0x20000, scoped, tag = 'scratch operand']
  %s0 = inlined_call_operand.vmem [shape: bf16[256,256], index: 0, kind: input, shape index: {}]
  %s1 = inlined_call_operand.vmem [shape: bf16[256,128], index: 1, kind: input, shape index: {}]
  %s2 = inlined_call_operand.vmem [shape: f32[256,1], index: 2, kind: input, shape index: {}]
  %s3 = inlined_call_operand.vmem [shape: f32[256,128], index: 3, kind: input, shape index: {}]
  %s4 = inlined_call_operand.vmem [shape: f32[256,128], index: 4, kind: output, shape index: {}]
  %s5 = sld [smem:[#allocation0]]
  $region34: #{_emp_gcn.3} parent=0
    _
  %s7 = ssub.s32 1, %s5
  %s8 = scalar_select 0, %s7, %s5
  // Predicated region
  $region2: #{_emp_gcn.3} parent=0 // pred_check
    _
  $region3: #{_emp_gcn.3} parent=0 // pred_check_branch
    %10 = sbr.rel (0) target = $region5
  $region4: #{_emp_gcn.3} parent=0 // pred_region
    _
  $region5: #{_emp_gcn.3} parent=0 // pred_fallthru
    _
  // Predicated region
  $region6: #{_emp_gcn.3} parent=0 // pred_check
    _
  $region7: #{_emp_gcn.3} parent=0 // pred_check_branch
    %12 = sbr.rel (0) target = $region9
  $region8: #{_emp_gcn.3} parent=0 // pred_region
    _
  $region9: #{_emp_gcn.3} parent=0 // pred_fallthru
    _
  // Predicated region
  $region10: #{_emp_gcn.3} parent=0 // pred_check
    _
  $region11: #{_emp_gcn.3} parent=0 // pred_check_branch
    %14 = sbr.rel (0) target = $region13
  $region12: #{_emp_gcn.3} parent=0 // pred_region
    _
  $region13: #{_emp_gcn.3} parent=0 // pred_fallthru
    _
  // Predicated region
  $region14: #{_emp_gcn.3} parent=0 // pred_check
    _
  $region15: #{_emp_gcn.3} parent=0 // pred_check_branch
    %16 = sbr.rel (0) target = $region17
  $region16: #{_emp_gcn.3} parent=0 // pred_region
    _
  $region17: #{_emp_gcn.3} parent=0 // pred_fallthru
    _
  %p18 = scmp.eq.s32.totalorder 0, 0
  // Predicated region
  $region18: #{_emp_gcn.3} parent=0 // pred_check
    %p19 = pneg %p18
  $region19: #{_emp_gcn.3} parent=0 // pred_check_branch
    %21 = sbr.rel (%p19) target = $region21
  $region20: #{_emp_gcn.3} parent=0 // pred_region
    %22 = vst [vmem:[#allocation2] sm:$0xff] 0.0
    %23 = vst [vmem:[#allocation2 + $0x8] sm:$0xff] 0.0
    %24 = vst [vmem:[#allocation2 + $0x10] sm:$0xff] 0.0
    %25 = vst [vmem:[#allocation2 + $0x18] sm:$0xff] 0.0
    %26 = vst [vmem:[#allocation2 + $0x20] sm:$0xff] 0.0
    %27 = vst [vmem:[#allocation2 + $0x28] sm:$0xff] 0.0
    %28 = vst [vmem:[#allocation2 + $0x30] sm:$0xff] 0.0
    %29 = vst [vmem:[#allocation2 + $0x38] sm:$0xff] 0.0
    %30 = vst [vmem:[#allocation2 + $0x40] sm:$0xff] 0.0
    %31 = vst [vmem:[#allocation2 + $0x48] sm:$0xff] 0.0
    %32 = vst [vmem:[#allocation2 + $0x50] sm:$0xff] 0.0
    %33 = vst [vmem:[#allocation2 + $0x58] sm:$0xff] 0.0
    %34 = vst [vmem:[#allocation2 + $0x60] sm:$0xff] 0.0
    %35 = vst [vmem:[#allocation2 + $0x68] sm:$0xff] 0.0
    %36 = vst [vmem:[#allocation2 + $0x70] sm:$0xff] 0.0
    %37 = vst [vmem:[#allocation2 + $0x78] sm:$0xff] 0.0
    %38 = vst [vmem:[#allocation2 + $0x80] sm:$0xff] 0.0
    %39 = vst [vmem:[#allocation2 + $0x88] sm:$0xff] 0.0
    %40 = vst [vmem:[#allocation2 + $0x90] sm:$0xff] 0.0
    %41 = vst [vmem:[#allocation2 + $0x98] sm:$0xff] 0.0
    %42 = vst [vmem:[#allocation2 + $0xa0] sm:$0xff] 0.0
    %43 = vst [vmem:[#allocation2 + $0xa8] sm:$0xff] 0.0
    %44 = vst [vmem:[#allocation2 + $0xb0] sm:$0xff] 0.0
    %45 = vst [vmem:[#allocation2 + $0xb8] sm:$0xff] 0.0
    %46 = vst [vmem:[#allocation2 + $0xc0] sm:$0xff] 0.0
    %47 = vst [vmem:[#allocation2 + $0xc8] sm:$0xff] 0.0
    %48 = vst [vmem:[#allocation2 + $0xd0] sm:$0xff] 0.0
    %49 = vst [vmem:[#allocation2 + $0xd8] sm:$0xff] 0.0
    %50 = vst [vmem:[#allocation2 + $0xe0] sm:$0xff] 0.0
    %51 = vst [vmem:[#allocation2 + $0xe8] sm:$0xff] 0.0
    %52 = vst [vmem:[#allocation2 + $0xf0] sm:$0xff] 0.0
    %53 = vst [vmem:[#allocation2 + $0xf8] sm:$0xff] 0.0
  $region21: #{_emp_gcn.3} parent=0 // pred_fallthru
    _
  %v54 = vld [vmem:[#allocation2] sm:$0xff]
  %v55 = vld [vmem:[#allocation2 + $0x8] sm:$0xff]
  %v56 = vld [vmem:[#allocation2 + $0x10] sm:$0xff]
  %v57 = vld [vmem:[#allocation2 + $0x18] sm:$0xff]
  %v58 = vld [vmem:[#allocation2 + $0x20] sm:$0xff]
  %v59 = vld [vmem:[#allocation2 + $0x28] sm:$0xff]
  %v60 = vld [vmem:[#allocation2 + $0x30] sm:$0xff]
  %v61 = vld [vmem:[#allocation2 + $0x38] sm:$0xff]
  %v62 = vld [vmem:[#allocation2 + $0x40] sm:$0xff]
  %v63 = vld [vmem:[#allocation2 + $0x48] sm:$0xff]
  %v64 = vld [vmem:[#allocation2 + $0x50] sm:$0xff]
  %v65 = vld [vmem:[#allocation2 + $0x58] sm:$0xff]
  %v66 = vld [vmem:[#allocation2 + $0x60] sm:$0xff]
  %v67 = vld [vmem:[#allocation2 + $0x68] sm:$0xff]
  %v68 = vld [vmem:[#allocation2 + $0x70] sm:$0xff]
  %v69 = vld [vmem:[#allocation2 + $0x78] sm:$0xff]
  %v70 = vld [vmem:[#allocation2 + $0x80] sm:$0xff]
  %v71 = vld [vmem:[#allocation2 + $0x88] sm:$0xff]
  %v72 = vld [vmem:[#allocation2 + $0x90] sm:$0xff]
  %v73 = vld [vmem:[#allocation2 + $0x98] sm:$0xff]
  %v74 = vld [vmem:[#allocation2 + $0xa0] sm:$0xff]
  %v75 = vld [vmem:[#allocation2 + $0xa8] sm:$0xff]
  %v76 = vld [vmem:[#allocation2 + $0xb0] sm:$0xff]
  %v77 = vld [vmem:[#allocation2 + $0xb8] sm:$0xff]
  %v78 = vld [vmem:[#allocation2 + $0xc0] sm:$0xff]
  %v79 = vld [vmem:[#allocation2 + $0xc8] sm:$0xff]
  %v80 = vld [vmem:[#allocation2 + $0xd0] sm:$0xff]
  %v81 = vld [vmem:[#allocation2 + $0xd8] sm:$0xff]
  %v82 = vld [vmem:[#allocation2 + $0xe0] sm:$0xff]
  %v83 = vld [vmem:[#allocation2 + $0xe8] sm:$0xff]
  %v84 = vld [vmem:[#allocation2 + $0xf0] sm:$0xff]
  %v85 = vld [vmem:[#allocation2 + $0xf8] sm:$0xff]
  %v86 = vld [vmem:[%s0] sm:$0xff]
  %v87 = vld [vmem:[%s0 + $0x8] sm:$0xff]
  %v88 = vld [vmem:[%s0 + $0x10] sm:$0xff]
  %v89 = vld [vmem:[%s0 + $0x18] sm:$0xff]
  %v90 = vld [vmem:[%s0 + $0x20] sm:$0xff]
  %v91 = vld [vmem:[%s0 + $0x28] sm:$0xff]
  %v92 = vld [vmem:[%s0 + $0x30] sm:$0xff]
  %v93 = vld [vmem:[%s0 + $0x38] sm:$0xff]
  %v94 = vld [vmem:[%s0 + $0x40] sm:$0xff]
  %v95 = vld [vmem:[%s0 + $0x48] sm:$0xff]
  %v96 = vld [vmem:[%s0 + $0x50] sm:$0xff]
  %v97 = vld [vmem:[%s0 + $0x58] sm:$0xff]
  %v98 = vld [vmem:[%s0 + $0x60] sm:$0xff]
  %v99 = vld [vmem:[%s0 + $0x68] sm:$0xff]
  %v100 = vld [vmem:[%s0 + $0x70] sm:$0xff]
  %v101 = vld [vmem:[%s0 + $0x78] sm:$0xff]
  %v102 = vld [vmem:[%s0 + $0x80] sm:$0xff]
  %v103 = vld [vmem:[%s0 + $0x88] sm:$0xff]
  %v104 = vld [vmem:[%s0 + $0x90] sm:$0xff]
  %v105 = vld [vmem:[%s0 + $0x98] sm:$0xff]
  %v106 = vld [vmem:[%s0 + $0xa0] sm:$0xff]
  %v107 = vld [vmem:[%s0 + $0xa8] sm:$0xff]
  %v108 = vld [vmem:[%s0 + $0xb0] sm:$0xff]
  %v109 = vld [vmem:[%s0 + $0xb8] sm:$0xff]
  %v110 = vld [vmem:[%s0 + $0xc0] sm:$0xff]
  %v111 = vld [vmem:[%s0 + $0xc8] sm:$0xff]
  %v112 = vld [vmem:[%s0 + $0xd0] sm:$0xff]
  %v113 = vld [vmem:[%s0 + $0xd8] sm:$0xff]
  %v114 = vld [vmem:[%s0 + $0xe0] sm:$0xff]
  %v115 = vld [vmem:[%s0 + $0xe8] sm:$0xff]
  %v116 = vld [vmem:[%s0 + $0xf0] sm:$0xff]
  %v117 = vld [vmem:[%s0 + $0xf8] sm:$0xff]
  %v118 = vld [vmem:[%s1] sm:$0xf]
  %v119 = vld [vmem:[%s1 + $0x4] sm:$0xf]
  %v120 = vld [vmem:[%s1 + $0x8] sm:$0xf]
  %v121 = vld [vmem:[%s1 + $0xc] sm:$0xf]
  %v122 = vld [vmem:[%s1 + $0x10] sm:$0xf]
  %v123 = vld [vmem:[%s1 + $0x14] sm:$0xf]
  %v124 = vld [vmem:[%s1 + $0x18] sm:$0xf]
  %v125 = vld [vmem:[%s1 + $0x1c] sm:$0xf]
  %v126 = vld [vmem:[%s1 + $0x20] sm:$0xf]
  %v127 = vld [vmem:[%s1 + $0x24] sm:$0xf]
  %v128 = vld [vmem:[%s1 + $0x28] sm:$0xf]
  %v129 = vld [vmem:[%s1 + $0x2c] sm:$0xf]
  %v130 = vld [vmem:[%s1 + $0x30] sm:$0xf]
  %v131 = vld [vmem:[%s1 + $0x34] sm:$0xf]
  %v132 = vld [vmem:[%s1 + $0x38] sm:$0xf]
  %v133 = vld [vmem:[%s1 + $0x3c] sm:$0xf]
  %v134 = vld [vmem:[%s1 + $0x40] sm:$0xf]
  %v135 = vld [vmem:[%s1 + $0x44] sm:$0xf]
  %v136 = vld [vmem:[%s1 + $0x48] sm:$0xf]
  %v137 = vld [vmem:[%s1 + $0x4c] sm:$0xf]
  %v138 = vld [vmem:[%s1 + $0x50] sm:$0xf]
  %v139 = vld [vmem:[%s1 + $0x54] sm:$0xf]
  %v140 = vld [vmem:[%s1 + $0x58] sm:$0xf]
  %v141 = vld [vmem:[%s1 + $0x5c] sm:$0xf]
  %v142 = vld [vmem:[%s1 + $0x60] sm:$0xf]
  %v143 = vld [vmem:[%s1 + $0x64] sm:$0xf]
  %v144 = vld [vmem:[%s1 + $0x68] sm:$0xf]
  %v145 = vld [vmem:[%s1 + $0x6c] sm:$0xf]
  %v146 = vld [vmem:[%s1 + $0x70] sm:$0xf]
  %v147 = vld [vmem:[%s1 + $0x74] sm:$0xf]
  %v148 = vld [vmem:[%s1 + $0x78] sm:$0xf]
  %v149 = vld [vmem:[%s1 + $0x7c] sm:$0xf]
  %v182 = vunpack.c.l.b16 %v86
  %v183 = vunpack.c.h.b16 %v86
  %v184 = vunpack.c.l.b16 %v87
  %v185 = vunpack.c.h.b16 %v87
  %v186 = vunpack.c.l.b16 %v88
  %v187 = vunpack.c.h.b16 %v88
  %v188 = vunpack.c.l.b16 %v89
  %v189 = vunpack.c.h.b16 %v89
  %v190 = vunpack.c.l.b16 %v90
  %v191 = vunpack.c.h.b16 %v90
  %v192 = vunpack.c.l.b16 %v91
  %v193 = vunpack.c.h.b16 %v91
  %v194 = vunpack.c.l.b16 %v92
  %v195 = vunpack.c.h.b16 %v92
  %v196 = vunpack.c.l.b16 %v93
  %v197 = vunpack.c.h.b16 %v93
  %v198 = vunpack.c.l.b16 %v94
  %v199 = vunpack.c.h.b16 %v94
  %v200 = vunpack.c.l.b16 %v95
  %v201 = vunpack.c.h.b16 %v95
  %v202 = vunpack.c.l.b16 %v96
  %v203 = vunpack.c.h.b16 %v96
  %v204 = vunpack.c.l.b16 %v97
  %v205 = vunpack.c.h.b16 %v97
  %v206 = vunpack.c.l.b16 %v98
  %v207 = vunpack.c.h.b16 %v98
  %v208 = vunpack.c.l.b16 %v99
  %v209 = vunpack.c.h.b16 %v99
  %v210 = vunpack.c.l.b16 %v100
  %v211 = vunpack.c.h.b16 %v100
  %v212 = vunpack.c.l.b16 %v101
  %v213 = vunpack.c.h.b16 %v101
  %v214 = vunpack.c.l.b16 %v102
  %v215 = vunpack.c.h.b16 %v102
  %v216 = vunpack.c.l.b16 %v103
  %v217 = vunpack.c.h.b16 %v103
  %v218 = vunpack.c.l.b16 %v104
  %v219 = vunpack.c.h.b16 %v104
  %v220 = vunpack.c.l.b16 %v105
  %v221 = vunpack.c.h.b16 %v105
  %v222 = vunpack.c.l.b16 %v106
  %v223 = vunpack.c.h.b16 %v106
  %v224 = vunpack.c.l.b16 %v107
  %v225 = vunpack.c.h.b16 %v107
  %v226 = vunpack.c.l.b16 %v108
  %v227 = vunpack.c.h.b16 %v108
  %v228 = vunpack.c.l.b16 %v109
  %v229 = vunpack.c.h.b16 %v109
  %v230 = vunpack.c.l.b16 %v110
  %v231 = vunpack.c.h.b16 %v110
  %v232 = vunpack.c.l.b16 %v111
  %v233 = vunpack.c.h.b16 %v111
  %v234 = vunpack.c.l.b16 %v112
  %v235 = vunpack.c.h.b16 %v112
  %v236 = vunpack.c.l.b16 %v113
  %v237 = vunpack.c.h.b16 %v113
  %v238 = vunpack.c.l.b16 %v114
  %v239 = vunpack.c.h.b16 %v114
  %v240 = vunpack.c.l.b16 %v115
  %v241 = vunpack.c.h.b16 %v115
  %v242 = vunpack.c.l.b16 %v116
  %v243 = vunpack.c.h.b16 %v116
  %v244 = vunpack.c.l.b16 %v117
  %v245 = vunpack.c.h.b16 %v117
  %v246 = vpack.c.b16 %v184, %v182
  %v247 = vpack.c.b16 %v185, %v183
  %v248 = vpack.c.b16 %v188, %v186
  %v249 = vpack.c.b16 %v189, %v187
  %v250 = vpack.c.b16 %v192, %v190
  %v251 = vpack.c.b16 %v193, %v191
  %v252 = vpack.c.b16 %v196, %v194
  %v253 = vpack.c.b16 %v197, %v195
  %v254 = vpack.c.b16 %v200, %v198
  %v255 = vpack.c.b16 %v201, %v199
  %v256 = vpack.c.b16 %v204, %v202
  %v257 = vpack.c.b16 %v205, %v203
  %v258 = vpack.c.b16 %v208, %v206
  %v259 = vpack.c.b16 %v209, %v207
  %v260 = vpack.c.b16 %v212, %v210
  %v261 = vpack.c.b16 %v213, %v211
  %v262 = vpack.c.b16 %v216, %v214
  %v263 = vpack.c.b16 %v217, %v215
  %v264 = vpack.c.b16 %v220, %v218
  %v265 = vpack.c.b16 %v221, %v219
  %v266 = vpack.c.b16 %v224, %v222
  %v267 = vpack.c.b16 %v225, %v223
  %v268 = vpack.c.b16 %v228, %v226
  %v269 = vpack.c.b16 %v229, %v227
  %v270 = vpack.c.b16 %v232, %v230
  %v271 = vpack.c.b16 %v233, %v231
  %v272 = vpack.c.b16 %v236, %v234
  %v273 = vpack.c.b16 %v237, %v235
  %v274 = vpack.c.b16 %v240, %v238
  %v275 = vpack.c.b16 %v241, %v239
  %v276 = vpack.c.b16 %v244, %v242
  %v277 = vpack.c.b16 %v245, %v243
  %v342 = vunpack.c.l.b16 %v118
  %v343 = vunpack.c.l.b16 %v119
  %v344 = vunpack.c.l.b16 %v120
  %v345 = vunpack.c.l.b16 %v121
  %v346 = vunpack.c.l.b16 %v122
  %v347 = vunpack.c.l.b16 %v123
  %v348 = vunpack.c.l.b16 %v124
  %v349 = vunpack.c.l.b16 %v125
  %v350 = vunpack.c.l.b16 %v126
  %v351 = vunpack.c.l.b16 %v127
  %v352 = vunpack.c.l.b16 %v128
  %v353 = vunpack.c.l.b16 %v129
  %v354 = vunpack.c.l.b16 %v130
  %v355 = vunpack.c.l.b16 %v131
  %v356 = vunpack.c.l.b16 %v132
  %v357 = vunpack.c.l.b16 %v133
  %v358 = vunpack.c.l.b16 %v134
  %v359 = vunpack.c.l.b16 %v135
  %v360 = vunpack.c.l.b16 %v136
  %v361 = vunpack.c.l.b16 %v137
  %v362 = vunpack.c.l.b16 %v138
  %v363 = vunpack.c.l.b16 %v139
  %v364 = vunpack.c.l.b16 %v140
  %v365 = vunpack.c.l.b16 %v141
  %v366 = vunpack.c.l.b16 %v142
  %v367 = vunpack.c.l.b16 %v143
  %v368 = vunpack.c.l.b16 %v144
  %v369 = vunpack.c.l.b16 %v145
  %v370 = vunpack.c.l.b16 %v146
  %v371 = vunpack.c.l.b16 %v147
  %v372 = vunpack.c.l.b16 %v148
  %v373 = vunpack.c.l.b16 %v149
  %v374 = vpack.c.b16 %v343, %v342
  %v375 = vpack.c.b16 %v345, %v344
  %v376 = vpack.c.b16 %v347, %v346
  %v377 = vpack.c.b16 %v349, %v348
  %v378 = vpack.c.b16 %v351, %v350
  %v379 = vpack.c.b16 %v353, %v352
  %v380 = vpack.c.b16 %v355, %v354
  %v381 = vpack.c.b16 %v357, %v356
  %v382 = vpack.c.b16 %v359, %v358
  %v383 = vpack.c.b16 %v361, %v360
  %v384 = vpack.c.b16 %v363, %v362
  %v385 = vpack.c.b16 %v365, %v364
  %v386 = vpack.c.b16 %v367, %v366
  %v387 = vpack.c.b16 %v369, %v368
  %v388 = vpack.c.b16 %v371, %v370
  %v389 = vpack.c.b16 %v373, %v372
  %406 = vmatprep.subr.bf16.mxu0 0
  %407 = vmatpush1.bf16.msra.mxu0 %v381
  %408 = vmatprep.subr.bf16.mxu0 0
  %409 = vmatpush1.bf16.msra.mxu0 %v380
  %410 = vmatprep.subr.bf16.mxu0 0
  %411 = vmatpush1.bf16.msra.mxu0 %v379
  %412 = vmatprep.subr.bf16.mxu0 0
  %413 = vmatpush1.bf16.msra.mxu0 %v378
  %414 = vmatprep.subr.bf16.mxu0 0
  %415 = vmatpush1.bf16.msra.mxu0 %v377
  %416 = vmatprep.subr.bf16.mxu0 0
  %417 = vmatpush1.bf16.msra.mxu0 %v376
  %418 = vmatprep.subr.bf16.mxu0 0
  %419 = vmatpush1.bf16.msra.mxu0 %v375
  %420 = vmatprep.subr.bf16.mxu0 0
  %421 = vmatpush1.bf16.msra.mxu0 %v374
  %422 = vmatprep.subr.bf16.mxu0 0
  %423 = vmatpush2.bf16.msra.mxu0 %v389
  %424 = vmatprep.subr.bf16.mxu0 0
  %425 = vmatpush2.bf16.msra.mxu0 %v388
  %426 = vmatprep.subr.bf16.mxu0 0
  %427 = vmatpush2.bf16.msra.mxu0 %v387
  %428 = vmatprep.subr.bf16.mxu0 0
  %429 = vmatpush2.bf16.msra.mxu0 %v386
  %430 = vmatprep.subr.bf16.mxu0 0
  %431 = vmatpush2.bf16.msra.mxu0 %v385
  %432 = vmatprep.subr.bf16.mxu0 0
  %433 = vmatpush2.bf16.msra.mxu0 %v384
  %434 = vmatprep.subr.bf16.mxu0 0
  %435 = vmatpush2.bf16.msra.mxu0 %v383
  %436 = vmatprep.subr.bf16.mxu0 0
  %437 = vmatpush2.bf16.msra.mxu0 %v382
  %438 = vmatprep.mubr.bf16.mxu0 %v247
  %439 = vmatmul.mubr.bf16.gmra.mxu0 %v246
  %v440 = vpop.f32.mrf.mxu0
  %v441 = vadd.f32 0.0, %v440
  %v442 = vpop.f32.mrf.mxu0
  %v443 = vpop.f32.mrf.mxu0
  %v444 = vadd.f32 0.0, %v443
  %v445 = vpop.f32.mrf.mxu0
  %446 = vmatprep.mubr.bf16.mxu0 %v249
  %447 = vmatmul.mubr.bf16.gmra.mxu0 %v248
  %v448 = vpop.f32.mrf.mxu0
  %v449 = vadd.f32 0.0, %v448
  %v450 = vpop.f32.mrf.mxu0
  %v451 = vpop.f32.mrf.mxu0
  %v452 = vadd.f32 0.0, %v451
  %v453 = vpop.f32.mrf.mxu0
  %454 = vmatprep.mubr.bf16.mxu0 %v251
  %455 = vmatmul.mubr.bf16.gmra.mxu0 %v250
  %v456 = vpop.f32.mrf.mxu0
  %v457 = vadd.f32 0.0, %v456
  %v458 = vpop.f32.mrf.mxu0
  %v459 = vpop.f32.mrf.mxu0
  %v460 = vadd.f32 0.0, %v459
  %v461 = vpop.f32.mrf.mxu0
  %462 = vmatprep.mubr.bf16.mxu0 %v253
  %463 = vmatmul.mubr.bf16.gmra.mxu0 %v252
  %v464 = vpop.f32.mrf.mxu0
  %v465 = vadd.f32 0.0, %v464
  %v466 = vpop.f32.mrf.mxu0
  %v467 = vpop.f32.mrf.mxu0
  %v468 = vadd.f32 0.0, %v467
  %v469 = vpop.f32.mrf.mxu0
  %470 = vmatprep.mubr.bf16.mxu0 %v255
  %471 = vmatmul.mubr.bf16.gmra.mxu0 %v254
  %v472 = vpop.f32.mrf.mxu0
  %v473 = vadd.f32 0.0, %v472
  %v474 = vpop.f32.mrf.mxu0
  %v475 = vpop.f32.mrf.mxu0
  %v476 = vadd.f32 0.0, %v475
  %v477 = vpop.f32.mrf.mxu0
  %478 = vmatprep.mubr.bf16.mxu0 %v257
  %479 = vmatmul.mubr.bf16.gmra.mxu0 %v256
  %v480 = vpop.f32.mrf.mxu0
  %v481 = vadd.f32 0.0, %v480
  %v482 = vpop.f32.mrf.mxu0
  %v483 = vpop.f32.mrf.mxu0
  %v484 = vadd.f32 0.0, %v483
  %v485 = vpop.f32.mrf.mxu0
  %486 = vmatprep.mubr.bf16.mxu0 %v259
  %487 = vmatmul.mubr.bf16.gmra.mxu0 %v258
  %v488 = vpop.f32.mrf.mxu0
  %v489 = vadd.f32 0.0, %v488
  %v490 = vpop.f32.mrf.mxu0
  %v491 = vpop.f32.mrf.mxu0
  %v492 = vadd.f32 0.0, %v491
  %v493 = vpop.f32.mrf.mxu0
  %494 = vmatprep.mubr.bf16.mxu0 %v261
  %495 = vmatmul.mubr.bf16.gmra.mxu0 %v260
  %v496 = vpop.f32.mrf.mxu0
  %v497 = vadd.f32 0.0, %v496
  %v498 = vpop.f32.mrf.mxu0
  %v499 = vpop.f32.mrf.mxu0
  %v500 = vadd.f32 0.0, %v499
  %v501 = vpop.f32.mrf.mxu0
  %502 = vmatprep.mubr.bf16.mxu0 %v263
  %503 = vmatmul.mubr.bf16.gmra.mxu0 %v262
  %v504 = vpop.f32.mrf.mxu0
  %v505 = vadd.f32 0.0, %v504
  %v506 = vpop.f32.mrf.mxu0
  %v507 = vpop.f32.mrf.mxu0
  %v508 = vadd.f32 0.0, %v507
  %v509 = vpop.f32.mrf.mxu0
  %510 = vmatprep.mubr.bf16.mxu0 %v265
  %511 = vmatmul.mubr.bf16.gmra.mxu0 %v264
  %v512 = vpop.f32.mrf.mxu0
  %v513 = vadd.f32 0.0, %v512
  %v514 = vpop.f32.mrf.mxu0
  %v515 = vpop.f32.mrf.mxu0
  %v516 = vadd.f32 0.0, %v515
  %v517 = vpop.f32.mrf.mxu0
  %518 = vmatprep.mubr.bf16.mxu0 %v267
  %519 = vmatmul.mubr.bf16.gmra.mxu0 %v266
  %v520 = vpop.f32.mrf.mxu0
  %v521 = vadd.f32 0.0, %v520
  %v522 = vpop.f32.mrf.mxu0
  %v523 = vpop.f32.mrf.mxu0
  %v524 = vadd.f32 0.0, %v523
  %v525 = vpop.f32.mrf.mxu0
  %526 = vmatprep.mubr.bf16.mxu0 %v269
  %527 = vmatmul.mubr.bf16.gmra.mxu0 %v268
  %v528 = vpop.f32.mrf.mxu0
  %v529 = vadd.f32 0.0, %v528
  %v530 = vpop.f32.mrf.mxu0
  %v531 = vpop.f32.mrf.mxu0
  %v532 = vadd.f32 0.0, %v531
  %v533 = vpop.f32.mrf.mxu0
  %534 = vmatprep.mubr.bf16.mxu0 %v271
  %535 = vmatmul.mubr.bf16.gmra.mxu0 %v270
  %v536 = vpop.f32.mrf.mxu0
  %v537 = vadd.f32 0.0, %v536
  %v538 = vpop.f32.mrf.mxu0
  %v539 = vpop.f32.mrf.mxu0
  %v540 = vadd.f32 0.0, %v539
  %v541 = vpop.f32.mrf.mxu0
  %542 = vmatprep.mubr.bf16.mxu0 %v273
  %543 = vmatmul.mubr.bf16.gmra.mxu0 %v272
  %v544 = vpop.f32.mrf.mxu0
  %v545 = vadd.f32 0.0, %v544
  %v546 = vpop.f32.mrf.mxu0
  %v547 = vpop.f32.mrf.mxu0
  %v548 = vadd.f32 0.0, %v547
  %v549 = vpop.f32.mrf.mxu0
  %550 = vmatprep.mubr.bf16.mxu0 %v275
  %551 = vmatmul.mubr.bf16.gmra.mxu0 %v274
  %v552 = vpop.f32.mrf.mxu0
  %v553 = vadd.f32 0.0, %v552
  %v554 = vpop.f32.mrf.mxu0
  %v555 = vpop.f32.mrf.mxu0
  %v556 = vadd.f32 0.0, %v555
  %v557 = vpop.f32.mrf.mxu0
  %558 = vmatprep.mubr.bf16.mxu0 %v277
  %559 = vmatmul.mubr.bf16.gmra.mxu0 %v276
  %v560 = vpop.f32.mrf.mxu0
  %v561 = vadd.f32 0.0, %v560
  %v562 = vpop.f32.mrf.mxu0
  %v563 = vpop.f32.mrf.mxu0
  %v564 = vadd.f32 0.0, %v563
  %v565 = vpop.f32.mrf.mxu0
  %566 = vdwg.mxu0
  %v567 = vadd.f32 %v54, %v441
  %v568 = vadd.f32 %v55, %v444
  %v569 = vadd.f32 %v56, %v449
  %v570 = vadd.f32 %v57, %v452
  %v571 = vadd.f32 %v58, %v457
  %v572 = vadd.f32 %v59, %v460
  %v573 = vadd.f32 %v60, %v465
  %v574 = vadd.f32 %v61, %v468
  %v575 = vadd.f32 %v62, %v473
  %v576 = vadd.f32 %v63, %v476
  %v577 = vadd.f32 %v64, %v481
  %v578 = vadd.f32 %v65, %v484
  %v579 = vadd.f32 %v66, %v489
  %v580 = vadd.f32 %v67, %v492
  %v581 = vadd.f32 %v68, %v497
  %v582 = vadd.f32 %v69, %v500
  %v583 = vadd.f32 %v70, %v505
  %v584 = vadd.f32 %v71, %v508
  %v585 = vadd.f32 %v72, %v513
  %v586 = vadd.f32 %v73, %v516
  %v587 = vadd.f32 %v74, %v521
  %v588 = vadd.f32 %v75, %v524
  %v589 = vadd.f32 %v76, %v529
  %v590 = vadd.f32 %v77, %v532
  %v591 = vadd.f32 %v78, %v537
  %v592 = vadd.f32 %v79, %v540
  %v593 = vadd.f32 %v80, %v545
  %v594 = vadd.f32 %v81, %v548
  %v595 = vadd.f32 %v82, %v553
  %v596 = vadd.f32 %v83, %v556
  %v597 = vadd.f32 %v84, %v561
  %v598 = vadd.f32 %v85, %v564
  %599 = vst [vmem:[#allocation2] sm:$0xff] %v567
  %600 = vst [vmem:[#allocation2 + $0x8] sm:$0xff] %v568
  %601 = vst [vmem:[#allocation2 + $0x10] sm:$0xff] %v569
  %602 = vst [vmem:[#allocation2 + $0x18] sm:$0xff] %v570
  %603 = vst [vmem:[#allocation2 + $0x20] sm:$0xff] %v571
  %604 = vst [vmem:[#allocation2 + $0x28] sm:$0xff] %v572
  %605 = vst [vmem:[#allocation2 + $0x30] sm:$0xff] %v573
  %606 = vst [vmem:[#allocation2 + $0x38] sm:$0xff] %v574
  %607 = vst [vmem:[#allocation2 + $0x40] sm:$0xff] %v575
  %608 = vst [vmem:[#allocation2 + $0x48] sm:$0xff] %v576
  %609 = vst [vmem:[#allocation2 + $0x50] sm:$0xff] %v577
  %610 = vst [vmem:[#allocation2 + $0x58] sm:$0xff] %v578
  %611 = vst [vmem:[#allocation2 + $0x60] sm:$0xff] %v579
  %612 = vst [vmem:[#allocation2 + $0x68] sm:$0xff] %v580
  %613 = vst [vmem:[#allocation2 + $0x70] sm:$0xff] %v581
  %614 = vst [vmem:[#allocation2 + $0x78] sm:$0xff] %v582
  %615 = vst [vmem:[#allocation2 + $0x80] sm:$0xff] %v583
  %616 = vst [vmem:[#allocation2 + $0x88] sm:$0xff] %v584
  %617 = vst [vmem:[#allocation2 + $0x90] sm:$0xff] %v585
  %618 = vst [vmem:[#allocation2 + $0x98] sm:$0xff] %v586
  %619 = vst [vmem:[#allocation2 + $0xa0] sm:$0xff] %v587
  %620 = vst [vmem:[#allocation2 + $0xa8] sm:$0xff] %v588
  %621 = vst [vmem:[#allocation2 + $0xb0] sm:$0xff] %v589
  %622 = vst [vmem:[#allocation2 + $0xb8] sm:$0xff] %v590
  %623 = vst [vmem:[#allocation2 + $0xc0] sm:$0xff] %v591
  %624 = vst [vmem:[#allocation2 + $0xc8] sm:$0xff] %v592
  %625 = vst [vmem:[#allocation2 + $0xd0] sm:$0xff] %v593
  %626 = vst [vmem:[#allocation2 + $0xd8] sm:$0xff] %v594
  %627 = vst [vmem:[#allocation2 + $0xe0] sm:$0xff] %v595
  %628 = vst [vmem:[#allocation2 + $0xe8] sm:$0xff] %v596
  %629 = vst [vmem:[#allocation2 + $0xf0] sm:$0xff] %v597
  %630 = vst [vmem:[#allocation2 + $0xf8] sm:$0xff] %v598
  // Predicated region
  $region22: #{_emp_gcn.3} parent=0 // pred_check
    %p631 = pneg %p18
  $region23: #{_emp_gcn.3} parent=0 // pred_check_branch
    %633 = sbr.rel (%p631) target = $region25
  $region24: #{_emp_gcn.3} parent=0 // pred_region
    %v634 = vld [vmem:[%s2] sm:$0xff]
    %v635 = vld [vmem:[%s2 + $0x8] sm:$0xff]
    %v636 = vld [vmem:[%s2 + $0x10] sm:$0xff]
    %v637 = vld [vmem:[%s2 + $0x18] sm:$0xff]
    %v638 = vld [vmem:[%s2 + $0x20] sm:$0xff]
    %v639 = vld [vmem:[%s2 + $0x28] sm:$0xff]
    %v640 = vld [vmem:[%s2 + $0x30] sm:$0xff]
    %v641 = vld [vmem:[%s2 + $0x38] sm:$0xff]
    %v642 = vld [vmem:[%s2 + $0x40] sm:$0xff]
    %v643 = vld [vmem:[%s2 + $0x48] sm:$0xff]
    %v644 = vld [vmem:[%s2 + $0x50] sm:$0xff]
    %v645 = vld [vmem:[%s2 + $0x58] sm:$0xff]
    %v646 = vld [vmem:[%s2 + $0x60] sm:$0xff]
    %v647 = vld [vmem:[%s2 + $0x68] sm:$0xff]
    %v648 = vld [vmem:[%s2 + $0x70] sm:$0xff]
    %v649 = vld [vmem:[%s2 + $0x78] sm:$0xff]
    %v650 = vld [vmem:[%s2 + $0x80] sm:$0xff]
    %v651 = vld [vmem:[%s2 + $0x88] sm:$0xff]
    %v652 = vld [vmem:[%s2 + $0x90] sm:$0xff]
    %v653 = vld [vmem:[%s2 + $0x98] sm:$0xff]
    %v654 = vld [vmem:[%s2 + $0xa0] sm:$0xff]
    %v655 = vld [vmem:[%s2 + $0xa8] sm:$0xff]
    %v656 = vld [vmem:[%s2 + $0xb0] sm:$0xff]
    %v657 = vld [vmem:[%s2 + $0xb8] sm:$0xff]
    %v658 = vld [vmem:[%s2 + $0xc0] sm:$0xff]
    %v659 = vld [vmem:[%s2 + $0xc8] sm:$0xff]
    %v660 = vld [vmem:[%s2 + $0xd0] sm:$0xff]
    %v661 = vld [vmem:[%s2 + $0xd8] sm:$0xff]
    %v662 = vld [vmem:[%s2 + $0xe0] sm:$0xff]
    %v663 = vld [vmem:[%s2 + $0xe8] sm:$0xff]
    %v664 = vld [vmem:[%s2 + $0xf0] sm:$0xff]
    %v665 = vld [vmem:[%s2 + $0xf8] sm:$0xff]
    %v666 = vld [vmem:[#allocation2] sm:$0xff]
    %v667 = vld [vmem:[#allocation2 + $0x8] sm:$0xff]
    %v668 = vld [vmem:[#allocation2 + $0x10] sm:$0xff]
    %v669 = vld [vmem:[#allocation2 + $0x18] sm:$0xff]
    %v670 = vld [vmem:[#allocation2 + $0x20] sm:$0xff]
    %v671 = vld [vmem:[#allocation2 + $0x28] sm:$0xff]
    %v672 = vld [vmem:[#allocation2 + $0x30] sm:$0xff]
    %v673 = vld [vmem:[#allocation2 + $0x38] sm:$0xff]
    %v674 = vld [vmem:[#allocation2 + $0x40] sm:$0xff]
    %v675 = vld [vmem:[#allocation2 + $0x48] sm:$0xff]
    %v676 = vld [vmem:[#allocation2 + $0x50] sm:$0xff]
    %v677 = vld [vmem:[#allocation2 + $0x58] sm:$0xff]
    %v678 = vld [vmem:[#allocation2 + $0x60] sm:$0xff]
    %v679 = vld [vmem:[#allocation2 + $0x68] sm:$0xff]
    %v680 = vld [vmem:[#allocation2 + $0x70] sm:$0xff]
    %v681 = vld [vmem:[#allocation2 + $0x78] sm:$0xff]
    %v682 = vld [vmem:[#allocation2 + $0x80] sm:$0xff]
    %v683 = vld [vmem:[#allocation2 + $0x88] sm:$0xff]
    %v684 = vld [vmem:[#allocation2 + $0x90] sm:$0xff]
    %v685 = vld [vmem:[#allocation2 + $0x98] sm:$0xff]
    %v686 = vld [vmem:[#allocation2 + $0xa0] sm:$0xff]
    %v687 = vld [vmem:[#allocation2 + $0xa8] sm:$0xff]
    %v688 = vld [vmem:[#allocation2 + $0xb0] sm:$0xff]
    %v689 = vld [vmem:[#allocation2 + $0xb8] sm:$0xff]
    %v690 = vld [vmem:[#allocation2 + $0xc0] sm:$0xff]
    %v691 = vld [vmem:[#allocation2 + $0xc8] sm:$0xff]
    %v692 = vld [vmem:[#allocation2 + $0xd0] sm:$0xff]
    %v693 = vld [vmem:[#allocation2 + $0xd8] sm:$0xff]
    %v694 = vld [vmem:[#allocation2 + $0xe0] sm:$0xff]
    %v695 = vld [vmem:[#allocation2 + $0xe8] sm:$0xff]
    %v696 = vld [vmem:[#allocation2 + $0xf0] sm:$0xff]
    %v697 = vld [vmem:[#allocation2 + $0xf8] sm:$0xff]
    %699 = vset.pattern.permute.xlu0 0
    %700 = vperm.xlu0 %699, %v634
    %v701 = vpop.permute.xlu0 %700
    %704 = vset.pattern.permute.xlu0 0
    %705 = vperm.xlu0 %704, %v635
    %v706 = vpop.permute.xlu0 %705
    %709 = vset.pattern.permute.xlu0 0
    %710 = vperm.xlu0 %709, %v636
    %v711 = vpop.permute.xlu0 %710
    %714 = vset.pattern.permute.xlu0 0
    %715 = vperm.xlu0 %714, %v637
    %v716 = vpop.permute.xlu0 %715
    %719 = vset.pattern.permute.xlu0 0
    %720 = vperm.xlu0 %719, %v638
    %v721 = vpop.permute.xlu0 %720
    %724 = vset.pattern.permute.xlu0 0
    %725 = vperm.xlu0 %724, %v639
    %v726 = vpop.permute.xlu0 %725
    %729 = vset.pattern.permute.xlu0 0
    %730 = vperm.xlu0 %729, %v640
    %v731 = vpop.permute.xlu0 %730
    %734 = vset.pattern.permute.xlu0 0
    %735 = vperm.xlu0 %734, %v641
    %v736 = vpop.permute.xlu0 %735
    %739 = vset.pattern.permute.xlu0 0
    %740 = vperm.xlu0 %739, %v642
    %v741 = vpop.permute.xlu0 %740
    %744 = vset.pattern.permute.xlu0 0
    %745 = vperm.xlu0 %744, %v643
    %v746 = vpop.permute.xlu0 %745
    %749 = vset.pattern.permute.xlu0 0
    %750 = vperm.xlu0 %749, %v644
    %v751 = vpop.permute.xlu0 %750
    %754 = vset.pattern.permute.xlu0 0
    %755 = vperm.xlu0 %754, %v645
    %v756 = vpop.permute.xlu0 %755
    %759 = vset.pattern.permute.xlu0 0
    %760 = vperm.xlu0 %759, %v646
    %v761 = vpop.permute.xlu0 %760
    %764 = vset.pattern.permute.xlu0 0
    %765 = vperm.xlu0 %764, %v647
    %v766 = vpop.permute.xlu0 %765
    %769 = vset.pattern.permute.xlu0 0
    %770 = vperm.xlu0 %769, %v648
    %v771 = vpop.permute.xlu0 %770
    %774 = vset.pattern.permute.xlu0 0
    %775 = vperm.xlu0 %774, %v649
    %v776 = vpop.permute.xlu0 %775
    %779 = vset.pattern.permute.xlu0 0
    %780 = vperm.xlu0 %779, %v650
    %v781 = vpop.permute.xlu0 %780
    %784 = vset.pattern.permute.xlu0 0
    %785 = vperm.xlu0 %784, %v651
    %v786 = vpop.permute.xlu0 %785
    %789 = vset.pattern.permute.xlu0 0
    %790 = vperm.xlu0 %789, %v652
    %v791 = vpop.permute.xlu0 %790
    %794 = vset.pattern.permute.xlu0 0
    %795 = vperm.xlu0 %794, %v653
    %v796 = vpop.permute.xlu0 %795
    %799 = vset.pattern.permute.xlu0 0
    %800 = vperm.xlu0 %799, %v654
    %v801 = vpop.permute.xlu0 %800
    %804 = vset.pattern.permute.xlu0 0
    %805 = vperm.xlu0 %804, %v655
    %v806 = vpop.permute.xlu0 %805
    %809 = vset.pattern.permute.xlu0 0
    %810 = vperm.xlu0 %809, %v656
    %v811 = vpop.permute.xlu0 %810
    %814 = vset.pattern.permute.xlu0 0
    %815 = vperm.xlu0 %814, %v657
    %v816 = vpop.permute.xlu0 %815
    %819 = vset.pattern.permute.xlu0 0
    %820 = vperm.xlu0 %819, %v658
    %v821 = vpop.permute.xlu0 %820
    %824 = vset.pattern.permute.xlu0 0
    %825 = vperm.xlu0 %824, %v659
    %v826 = vpop.permute.xlu0 %825
    %829 = vset.pattern.permute.xlu0 0
    %830 = vperm.xlu0 %829, %v660
    %v831 = vpop.permute.xlu0 %830
    %834 = vset.pattern.permute.xlu0 0
    %835 = vperm.xlu0 %834, %v661
    %v836 = vpop.permute.xlu0 %835
    %839 = vset.pattern.permute.xlu0 0
    %840 = vperm.xlu0 %839, %v662
    %v841 = vpop.permute.xlu0 %840
    %844 = vset.pattern.permute.xlu0 0
    %845 = vperm.xlu0 %844, %v663
    %v846 = vpop.permute.xlu0 %845
    %849 = vset.pattern.permute.xlu0 0
    %850 = vperm.xlu0 %849, %v664
    %v851 = vpop.permute.xlu0 %850
    %854 = vset.pattern.permute.xlu0 0
    %855 = vperm.xlu0 %854, %v665
    %v856 = vpop.permute.xlu0 %855
    %v858 = vmul.f32 %v701, %v666
    %v859 = vmul.f32 %v706, %v667
    %v860 = vmul.f32 %v711, %v668
    %v861 = vmul.f32 %v716, %v669
    %v862 = vmul.f32 %v721, %v670
    %v863 = vmul.f32 %v726, %v671
    %v864 = vmul.f32 %v731, %v672
    %v865 = vmul.f32 %v736, %v673
    %v866 = vmul.f32 %v741, %v674
    %v867 = vmul.f32 %v746, %v675
    %v868 = vmul.f32 %v751, %v676
    %v869 = vmul.f32 %v756, %v677
    %v870 = vmul.f32 %v761, %v678
    %v871 = vmul.f32 %v766, %v679
    %v872 = vmul.f32 %v771, %v680
    %v873 = vmul.f32 %v776, %v681
    %v874 = vmul.f32 %v781, %v682
    %v875 = vmul.f32 %v786, %v683
    %v876 = vmul.f32 %v791, %v684
    %v877 = vmul.f32 %v796, %v685
    %v878 = vmul.f32 %v801, %v686
    %v879 = vmul.f32 %v806, %v687
    %v880 = vmul.f32 %v811, %v688
    %v881 = vmul.f32 %v816, %v689
    %v882 = vmul.f32 %v821, %v690
    %v883 = vmul.f32 %v826, %v691
    %v884 = vmul.f32 %v831, %v692
    %v885 = vmul.f32 %v836, %v693
    %v886 = vmul.f32 %v841, %v694
    %v887 = vmul.f32 %v846, %v695
    %v888 = vmul.f32 %v851, %v696
    %v889 = vmul.f32 %v856, %v697
    %v890 = vld [vmem:[%s3] sm:$0xff]
    %v891 = vld [vmem:[%s3 + $0x8] sm:$0xff]
    %v892 = vld [vmem:[%s3 + $0x10] sm:$0xff]
    %v893 = vld [vmem:[%s3 + $0x18] sm:$0xff]
    %v894 = vld [vmem:[%s3 + $0x20] sm:$0xff]
    %v895 = vld [vmem:[%s3 + $0x28] sm:$0xff]
    %v896 = vld [vmem:[%s3 + $0x30] sm:$0xff]
    %v897 = vld [vmem:[%s3 + $0x38] sm:$0xff]
    %v898 = vld [vmem:[%s3 + $0x40] sm:$0xff]
    %v899 = vld [vmem:[%s3 + $0x48] sm:$0xff]
    %v900 = vld [vmem:[%s3 + $0x50] sm:$0xff]
    %v901 = vld [vmem:[%s3 + $0x58] sm:$0xff]
    %v902 = vld [vmem:[%s3 + $0x60] sm:$0xff]
    %v903 = vld [vmem:[%s3 + $0x68] sm:$0xff]
    %v904 = vld [vmem:[%s3 + $0x70] sm:$0xff]
    %v905 = vld [vmem:[%s3 + $0x78] sm:$0xff]
    %v906 = vld [vmem:[%s3 + $0x80] sm:$0xff]
    %v907 = vld [vmem:[%s3 + $0x88] sm:$0xff]
    %v908 = vld [vmem:[%s3 + $0x90] sm:$0xff]
    %v909 = vld [vmem:[%s3 + $0x98] sm:$0xff]
    %v910 = vld [vmem:[%s3 + $0xa0] sm:$0xff]
    %v911 = vld [vmem:[%s3 + $0xa8] sm:$0xff]
    %v912 = vld [vmem:[%s3 + $0xb0] sm:$0xff]
    %v913 = vld [vmem:[%s3 + $0xb8] sm:$0xff]
    %v914 = vld [vmem:[%s3 + $0xc0] sm:$0xff]
    %v915 = vld [vmem:[%s3 + $0xc8] sm:$0xff]
    %v916 = vld [vmem:[%s3 + $0xd0] sm:$0xff]
    %v917 = vld [vmem:[%s3 + $0xd8] sm:$0xff]
    %v918 = vld [vmem:[%s3 + $0xe0] sm:$0xff]
    %v919 = vld [vmem:[%s3 + $0xe8] sm:$0xff]
    %v920 = vld [vmem:[%s3 + $0xf0] sm:$0xff]
    %v921 = vld [vmem:[%s3 + $0xf8] sm:$0xff]
    %v922 = vadd.f32 %v858, %v890
    %v923 = vadd.f32 %v859, %v891
    %v924 = vadd.f32 %v860, %v892
    %v925 = vadd.f32 %v861, %v893
    %v926 = vadd.f32 %v862, %v894
    %v927 = vadd.f32 %v863, %v895
    %v928 = vadd.f32 %v864, %v896
    %v929 = vadd.f32 %v865, %v897
    %v930 = vadd.f32 %v866, %v898
    %v931 = vadd.f32 %v867, %v899
    %v932 = vadd.f32 %v868, %v900
    %v933 = vadd.f32 %v869, %v901
    %v934 = vadd.f32 %v870, %v902
    %v935 = vadd.f32 %v871, %v903
    %v936 = vadd.f32 %v872, %v904
    %v937 = vadd.f32 %v873, %v905
    %v938 = vadd.f32 %v874, %v906
    %v939 = vadd.f32 %v875, %v907
    %v940 = vadd.f32 %v876, %v908
    %v941 = vadd.f32 %v877, %v909
    %v942 = vadd.f32 %v878, %v910
    %v943 = vadd.f32 %v879, %v911
    %v944 = vadd.f32 %v880, %v912
    %v945 = vadd.f32 %v881, %v913
    %v946 = vadd.f32 %v882, %v914
    %v947 = vadd.f32 %v883, %v915
    %v948 = vadd.f32 %v884, %v916
    %v949 = vadd.f32 %v885, %v917
    %v950 = vadd.f32 %v886, %v918
    %v951 = vadd.f32 %v887, %v919
    %v952 = vadd.f32 %v888, %v920
    %v953 = vadd.f32 %v889, %v921
    %954 = vst [vmem:[%s4] sm:$0xff] %v922
    %955 = vst [vmem:[%s4 + $0x8] sm:$0xff] %v923
    %956 = vst [vmem:[%s4 + $0x10] sm:$0xff] %v924
    %957 = vst [vmem:[%s4 + $0x18] sm:$0xff] %v925
    %958 = vst [vmem:[%s4 + $0x20] sm:$0xff] %v926
    %959 = vst [vmem:[%s4 + $0x28] sm:$0xff] %v927
    %960 = vst [vmem:[%s4 + $0x30] sm:$0xff] %v928
    %961 = vst [vmem:[%s4 + $0x38] sm:$0xff] %v929
    %962 = vst [vmem:[%s4 + $0x40] sm:$0xff] %v930
    %963 = vst [vmem:[%s4 + $0x48] sm:$0xff] %v931
    %964 = vst [vmem:[%s4 + $0x50] sm:$0xff] %v932
    %965 = vst [vmem:[%s4 + $0x58] sm:$0xff] %v933
    %966 = vst [vmem:[%s4 + $0x60] sm:$0xff] %v934
    %967 = vst [vmem:[%s4 + $0x68] sm:$0xff] %v935
    %968 = vst [vmem:[%s4 + $0x70] sm:$0xff] %v936
    %969 = vst [vmem:[%s4 + $0x78] sm:$0xff] %v937
    %970 = vst [vmem:[%s4 + $0x80] sm:$0xff] %v938
    %971 = vst [vmem:[%s4 + $0x88] sm:$0xff] %v939
    %972 = vst [vmem:[%s4 + $0x90] sm:$0xff] %v940
    %973 = vst [vmem:[%s4 + $0x98] sm:$0xff] %v941
    %974 = vst [vmem:[%s4 + $0xa0] sm:$0xff] %v942
    %975 = vst [vmem:[%s4 + $0xa8] sm:$0xff] %v943
    %976 = vst [vmem:[%s4 + $0xb0] sm:$0xff] %v944
    %977 = vst [vmem:[%s4 + $0xb8] sm:$0xff] %v945
    %978 = vst [vmem:[%s4 + $0xc0] sm:$0xff] %v946
    %979 = vst [vmem:[%s4 + $0xc8] sm:$0xff] %v947
    %980 = vst [vmem:[%s4 + $0xd0] sm:$0xff] %v948
    %981 = vst [vmem:[%s4 + $0xd8] sm:$0xff] %v949
    %982 = vst [vmem:[%s4 + $0xe0] sm:$0xff] %v950
    %983 = vst [vmem:[%s4 + $0xe8] sm:$0xff] %v951
    %984 = vst [vmem:[%s4 + $0xf0] sm:$0xff] %v952
    %985 = vst [vmem:[%s4 + $0xf8] sm:$0xff] %v953
  $region25: #{_emp_gcn.3} parent=0 // pred_fallthru
    _
  // Predicated region
  $region26: #{_emp_gcn.3} parent=0 // pred_check
    _
  $region27: #{_emp_gcn.3} parent=0 // pred_check_branch
    %987 = sbr.rel (0) target = $region29
  $region28: #{_emp_gcn.3} parent=0 // pred_region
    _
  $region29: #{_emp_gcn.3} parent=0 // pred_fallthru
    _
  // Predicated region
  $region30: #{_emp_gcn.3} parent=0 // pred_check
    _
  $region31: #{_emp_gcn.3} parent=0 // pred_check_branch
    %989 = sbr.rel (0) target = $region33
  $region32: #{_emp_gcn.3} parent=0 // pred_region
    _
  $region33: #{_emp_gcn.3} parent=0 // pred_fallthru
    _

</llo_original>
